<compile_context>
chip_gen: v7x
topology: tpu7x:2x2x1
jax: 0.10.0
libtpu: 0.0.40
codegen_flags: <defaults>
</compile_context>

<pallas_src>
import jax
import jax.numpy as jnp
from jax.experimental import pallas as pl
from jax.experimental.pallas import tpu as pltpu

LANE = 128   # lane grain (last dim) -> unmasked vreg loads / lane-dense stores
ROW = 16     # sublane (row/M) grain: 16 covers bf16 packing (and f32's 8)


def _round_up(x, m):
    return ((x + m - 1) // m) * m


# ----------------------------- fused kernel --------------------------------

def make_fused_kernel(radius):
    """x = fc1[r](l[r]); for i=r-1..0: x = fc1[i](l[i]) + adj[i] @ fc2[i](x)."""
    bf16 = jnp.bfloat16

    def kernel(*refs):
        idx = 0
        l = refs[idx:idx + radius + 1]
        idx += radius + 1
        adjs = refs[idx:idx + radius]
        idx += radius
        fc1 = [refs[idx + 4 * i: idx + 4 * i + 4] for i in range(radius + 1)]
        idx += 4 * (radius + 1)
        fc2 = [refs[idx + 4 * i: idx + 4 * i + 4] for i in range(radius)]
        idx += 4 * radius
        o_ref = refs[idx]

        def mlp(x_bf16, p):
            # bf16 MXU operands, f32 accumulate; bias add + ReLU in f32 (VPU).
            w1, b1, w2, b2 = p
            h = jnp.maximum(
                jnp.dot(x_bf16, w1[...], preferred_element_type=jnp.float32)
                + b1[...], 0.0)
            return (jnp.dot(h.astype(bf16), w2[...],
                            preferred_element_type=jnp.float32) + b2[...])

        # Initial x = fc1[radius](l[radius])  (folded in: no separate launch).
        x = mlp(l[radius][...], fc1[radius])

        for i in range(radius - 1, -1, -1):            # unrolled at trace time
            y1 = mlp(l[i][...], fc1[i])                # fc1[i](l[i])   (f32)
            y2 = mlp(x.astype(bf16), fc2[i])           # fc2[i](x)      (f32)
            # Two dots + add (no concat copies).  adj's zero-padded columns
            # kill the bias garbage sitting in y2's padded rows.
            x = y1 + jnp.dot(adjs[i][...], y2.astype(bf16),
                             preferred_element_type=jnp.float32)
            # dropout(x): identity in eval mode.

        o_ref[...] = x

    return kernel


# ------------------------------ wrapper -------------------------------------

def _pad2(a, r, c, dtype):
    a = jnp.asarray(a, jnp.float32)
    a = jnp.pad(a, ((0, r - a.shape[0]), (0, c - a.shape[1])))
    return a.astype(dtype)


def prepare_params(fc1_params, fc2_params, radius, input_dim, output_dim):
    """Pad + cast weights ONCE (module-init time, not per forward call).
    Weights -> bf16 (MXU operands); biases stay f32 (VPU adds)."""
    d_in = _round_up(input_dim, LANE)
    d_hid = _round_up(output_dim, LANE)   # MLP hidden dim == output_dim here
    d_out = _round_up(output_dim, LANE)

    def pad_mlp(p, din):
        w1, b1, w2, b2 = p
        return (_pad2(w1, din, d_hid, jnp.bfloat16),
                _pad2(b1, 1, d_hid, jnp.float32),
                _pad2(w2, d_hid, d_out, jnp.bfloat16),
                _pad2(b2, 1, d_out, jnp.float32))

    fc1_flat, fc2_flat = [], []
    for p in fc1_params:
        fc1_flat += list(pad_mlp(p, d_in))
    for p in fc2_params:
        fc2_flat += list(pad_mlp(p, d_out))
    return fc1_flat, fc2_flat


def message_passing_forward(adj, features, fc1_flat, fc2_flat, radius,
                            input_dim, output_dim):
    """Pallas implementation of MessagePassing.forward (eval mode)."""
    n = [f.shape[0] for f in features]
    # Row dims only need the 16-row grain.  Node counts n[1..radius] ALSO act
    # as adj lane (column) dims and as the K dim of adj @ fc2(x), so they stay
    # 128-aligned (zero padding there also guarantees the row-garbage kill).
    n_pad = [_round_up(n[0], ROW)] + [_round_up(v, LANE) for v in n[1:]]
    d_in = _round_up(input_dim, LANE)
    d_hid = _round_up(output_dim, LANE)
    d_out = _round_up(output_dim, LANE)

    l_p = [_pad2(features[i], n_pad[i], d_in, jnp.bfloat16)
           for i in range(radius + 1)]
    adj_p = [_pad2(adj[i], n_pad[i], n_pad[i + 1], jnp.bfloat16)
             for i in range(radius)]

    args = list(l_p) + list(adj_p) + list(fc1_flat) + list(fc2_flat)

    # Advisory cost estimate from the real padded/bf16 shapes.
    flops = 2 * n_pad[radius] * (d_in * d_hid + d_hid * d_out)
    for i in range(radius):
        flops += 2 * n_pad[i] * (d_in * d_hid + d_hid * d_out)        # fc1[i]
        flops += 2 * n_pad[i + 1] * (d_out * d_hid + d_hid * d_out)   # fc2[i]
        flops += 2 * n_pad[i] * n_pad[i + 1] * d_out                  # adj @ y2
    out_bytes = 4 * n_pad[0] * d_out
    bytes_accessed = int(sum(int(a.size) * a.dtype.itemsize for a in args)
                         + out_bytes)

    # Explicit scoped-VMEM budget (args + intermediates + headroom), clamped.
    vmem_bytes = int(min(max(2 * bytes_accessed + (4 << 20), 16 << 20),
                         120 << 20))

    vmem = pl.BlockSpec(memory_space=pltpu.MemorySpace.VMEM)
    out_p = pl.pallas_call(
        make_fused_kernel(radius),
        out_shape=jax.ShapeDtypeStruct((n_pad[0], d_out), jnp.float32),
        in_specs=[vmem] * len(args),
        out_specs=vmem,
        compiler_params=pltpu.CompilerParams(vmem_limit_bytes=vmem_bytes),
        cost_estimate=pl.CostEstimate(
            flops=flops, transcendentals=0, bytes_accessed=bytes_accessed),
    )(*args)

    # Slice padded rows/cols back off.
    return out_p[:n[0], :output_dim]


# ---------------------------- reference ------------------------------------

def _mlp_ref(x, p):
    w1, b1, w2, b2 = p
    return jnp.maximum(x @ w1 + b1, 0.0) @ w2 + b2


def message_passing_ref(adj, features, fc1_params, fc2_params, radius):
    l = [features[i] for i in range(radius + 1)]
    x = None
    for i in range(radius - 1, -1, -1):
        if i == radius - 1:
            x = _mlp_ref(l[i + 1], fc1_params[i + 1])
        x = _mlp_ref(l[i], fc1_params[i]) + adj[i] @ _mlp_ref(x, fc2_params[i])
    return x


# ------------------------------ setup --------------------------------------

def init_mlp_params(key, in_dim, hid_dim, out_dim):
    k1, k2, k3, k4 = jax.random.split(key, 4)
    lim1 = 1.0 / (in_dim ** 0.5)
    lim2 = 1.0 / (hid_dim ** 0.5)
    w1 = jax.random.uniform(k1, (in_dim, hid_dim), jnp.float32, -lim1, lim1)
    b1 = jax.random.uniform(k2, (1, hid_dim), jnp.float32, -lim1, lim1)
    w2 = jax.random.uniform(k3, (hid_dim, out_dim), jnp.float32, -lim2, lim2)
    b2 = jax.random.uniform(k4, (1, out_dim), jnp.float32, -lim2, lim2)
    return (w1, b1, w2, b2)


if __name__ == "__main__":
    radius = 2
    input_dim = 16
    output_dim = 32
    # node counts per radius level: features[i] has shape (n_nodes[i], input_dim)
    n_nodes = [8, 12, 16]

    key = jax.random.PRNGKey(0)
    keys = jax.random.split(key, 2 * (radius + 1) + radius + radius)
    ki = iter(range(len(keys)))

    # parameters: fc1 has radius+1 MLPs (input_dim -> output_dim -> output_dim),
    #             fc2 has radius   MLPs (output_dim -> output_dim -> output_dim)
    fc1_params = [init_mlp_params(keys[next(ki)], input_dim, output_dim, output_dim)
                  for _ in range(radius + 1)]
    fc2_params = [init_mlp_params(keys[next(ki)], output_dim, output_dim, output_dim)
                  for _ in range(radius)]

    # inputs: features[i] (n_i, input_dim); adj[i] dense (n_i, n_{i+1})
    features = [jax.random.normal(keys[next(ki)], (n_nodes[i], input_dim),
                                  jnp.float32)
                for i in range(radius + 1)]
    adj = [jax.random.normal(keys[next(ki)], (n_nodes[i], n_nodes[i + 1]),
                             jnp.float32) * 0.1
           for i in range(radius)]

    # Weight padding/casting done once ("module init"), not per forward call.
    fc1_flat, fc2_flat = prepare_params(fc1_params, fc2_params, radius,
                                        input_dim, output_dim)

    out = message_passing_forward(adj, features, fc1_flat, fc2_flat, radius,
                                  input_dim, output_dim)
    out = jax.block_until_ready(out)

    ref = message_passing_ref(adj, features, fc1_params, fc2_params, radius)
    assert out.shape == (n_nodes[0], output_dim)
    # Tolerance relaxed vs pure-f32: MXU operands are bf16 (f32 accumulate).
    assert jnp.allclose(out, ref, atol=5e-2, rtol=5e-2), "mismatch vs reference"

    print("KERNEL_OK")
</pallas_src>

<mosaic_0001>
module attributes {stable_mosaic.version = 11 : i64} {
  func.func @kernel(%arg0: memref<16x128xbf16, #tpu.memory_space<vmem>>, %arg1: memref<128x128xbf16, #tpu.memory_space<vmem>>, %arg2: memref<128x128xbf16, #tpu.memory_space<vmem>>, %arg3: memref<16x128xbf16, #tpu.memory_space<vmem>>, %arg4: memref<128x128xbf16, #tpu.memory_space<vmem>>, %arg5: memref<128x128xbf16, #tpu.memory_space<vmem>>, %arg6: memref<1x128xf32, #tpu.memory_space<vmem>>, %arg7: memref<128x128xbf16, #tpu.memory_space<vmem>>, %arg8: memref<1x128xf32, #tpu.memory_space<vmem>>, %arg9: memref<128x128xbf16, #tpu.memory_space<vmem>>, %arg10: memref<1x128xf32, #tpu.memory_space<vmem>>, %arg11: memref<128x128xbf16, #tpu.memory_space<vmem>>, %arg12: memref<1x128xf32, #tpu.memory_space<vmem>>, %arg13: memref<128x128xbf16, #tpu.memory_space<vmem>>, %arg14: memref<1x128xf32, #tpu.memory_space<vmem>>, %arg15: memref<128x128xbf16, #tpu.memory_space<vmem>>, %arg16: memref<1x128xf32, #tpu.memory_space<vmem>>, %arg17: memref<128x128xbf16, #tpu.memory_space<vmem>>, %arg18: memref<1x128xf32, #tpu.memory_space<vmem>>, %arg19: memref<128x128xbf16, #tpu.memory_space<vmem>>, %arg20: memref<1x128xf32, #tpu.memory_space<vmem>>, %arg21: memref<128x128xbf16, #tpu.memory_space<vmem>>, %arg22: memref<1x128xf32, #tpu.memory_space<vmem>>, %arg23: memref<128x128xbf16, #tpu.memory_space<vmem>>, %arg24: memref<1x128xf32, #tpu.memory_space<vmem>>, %arg25: memref<16x128xf32, #tpu.memory_space<vmem>>) attributes {dimension_semantics = [], scalar_prefetch = 0 : i64, scratch_operands = 0 : i64, tpu.core_type = #tpu.core_type<tc>} {
    %c0 = arith.constant 0 : index
    %c0_0 = arith.constant 0 : index
    %0 = vector.load %arg2[%c0, %c0_0] : memref<128x128xbf16, #tpu.memory_space<vmem>>, vector<128x128xbf16>
    %c0_1 = arith.constant 0 : index
    %c0_2 = arith.constant 0 : index
    %1 = vector.load %arg13[%c0_1, %c0_2] : memref<128x128xbf16, #tpu.memory_space<vmem>>, vector<128x128xbf16>
    %cst = arith.constant dense<0.000000e+00> : vector<128x128xf32>
    %2 = tpu.matmul %0, %1, %cst {dimension_numbers = #tpu.dot_dimension_numbers<[1], [0], [0], [1], [0, 0, 1, 1], [], []>} : vector<128x128xbf16>, vector<128x128xbf16>, vector<128x128xf32> -> vector<128x128xf32>
    %c0_3 = arith.constant 0 : index
    %c0_4 = arith.constant 0 : index
    %3 = vector.load %arg14[%c0_3, %c0_4] : memref<1x128xf32, #tpu.memory_space<vmem>>, vector<1x128xf32>
    %4 = vector.broadcast %3 : vector<1x128xf32> to vector<128x128xf32>
    %5 = arith.addf %2, %4 : vector<128x128xf32>
    %cst_5 = arith.constant 0.000000e+00 : f32
    %6 = vector.broadcast %cst_5 : f32 to vector<128x128xf32>
    %7 = arith.maximumf %5, %6 : vector<128x128xf32>
    %8 = arith.truncf %7 : vector<128x128xf32> to vector<128x128xbf16>
    %c0_6 = arith.constant 0 : index
    %c0_7 = arith.constant 0 : index
    %9 = vector.load %arg15[%c0_6, %c0_7] : memref<128x128xbf16, #tpu.memory_space<vmem>>, vector<128x128xbf16>
    %cst_8 = arith.constant dense<0.000000e+00> : vector<128x128xf32>
    %10 = tpu.matmul %8, %9, %cst_8 {dimension_numbers = #tpu.dot_dimension_numbers<[1], [0], [0], [1], [0, 0, 1, 1], [], []>} : vector<128x128xbf16>, vector<128x128xbf16>, vector<128x128xf32> -> vector<128x128xf32>
    %c0_9 = arith.constant 0 : index
    %c0_10 = arith.constant 0 : index
    %11 = vector.load %arg16[%c0_9, %c0_10] : memref<1x128xf32, #tpu.memory_space<vmem>>, vector<1x128xf32>
    %12 = vector.broadcast %11 : vector<1x128xf32> to vector<128x128xf32>
    %13 = arith.addf %10, %12 : vector<128x128xf32>
    %c0_11 = arith.constant 0 : index
    %c0_12 = arith.constant 0 : index
    %14 = vector.load %arg1[%c0_11, %c0_12] : memref<128x128xbf16, #tpu.memory_space<vmem>>, vector<128x128xbf16>
    %c0_13 = arith.constant 0 : index
    %c0_14 = arith.constant 0 : index
    %15 = vector.load %arg9[%c0_13, %c0_14] : memref<128x128xbf16, #tpu.memory_space<vmem>>, vector<128x128xbf16>
    %cst_15 = arith.constant dense<0.000000e+00> : vector<128x128xf32>
    %16 = tpu.matmul %14, %15, %cst_15 {dimension_numbers = #tpu.dot_dimension_numbers<[1], [0], [0], [1], [0, 0, 1, 1], [], []>} : vector<128x128xbf16>, vector<128x128xbf16>, vector<128x128xf32> -> vector<128x128xf32>
    %c0_16 = arith.constant 0 : index
    %c0_17 = arith.constant 0 : index
    %17 = vector.load %arg10[%c0_16, %c0_17] : memref<1x128xf32, #tpu.memory_space<vmem>>, vector<1x128xf32>
    %18 = vector.broadcast %17 : vector<1x128xf32> to vector<128x128xf32>
    %19 = arith.addf %16, %18 : vector<128x128xf32>
    %cst_18 = arith.constant 0.000000e+00 : f32
    %20 = vector.broadcast %cst_18 : f32 to vector<128x128xf32>
    %21 = arith.maximumf %19, %20 : vector<128x128xf32>
    %22 = arith.truncf %21 : vector<128x128xf32> to vector<128x128xbf16>
    %c0_19 = arith.constant 0 : index
    %c0_20 = arith.constant 0 : index
    %23 = vector.load %arg11[%c0_19, %c0_20] : memref<128x128xbf16, #tpu.memory_space<vmem>>, vector<128x128xbf16>
    %cst_21 = arith.constant dense<0.000000e+00> : vector<128x128xf32>
    %24 = tpu.matmul %22, %23, %cst_21 {dimension_numbers = #tpu.dot_dimension_numbers<[1], [0], [0], [1], [0, 0, 1, 1], [], []>} : vector<128x128xbf16>, vector<128x128xbf16>, vector<128x128xf32> -> vector<128x128xf32>
    %c0_22 = arith.constant 0 : index
    %c0_23 = arith.constant 0 : index
    %25 = vector.load %arg12[%c0_22, %c0_23] : memref<1x128xf32, #tpu.memory_space<vmem>>, vector<1x128xf32>
    %26 = vector.broadcast %25 : vector<1x128xf32> to vector<128x128xf32>
    %27 = arith.addf %24, %26 : vector<128x128xf32>
    %28 = arith.truncf %13 : vector<128x128xf32> to vector<128x128xbf16>
    %c0_24 = arith.constant 0 : index
    %c0_25 = arith.constant 0 : index
    %29 = vector.load %arg21[%c0_24, %c0_25] : memref<128x128xbf16, #tpu.memory_space<vmem>>, vector<128x128xbf16>
    %cst_26 = arith.constant dense<0.000000e+00> : vector<128x128xf32>
    %30 = tpu.matmul %28, %29, %cst_26 {dimension_numbers = #tpu.dot_dimension_numbers<[1], [0], [0], [1], [0, 0, 1, 1], [], []>} : vector<128x128xbf16>, vector<128x128xbf16>, vector<128x128xf32> -> vector<128x128xf32>
    %c0_27 = arith.constant 0 : index
    %c0_28 = arith.constant 0 : index
    %31 = vector.load %arg22[%c0_27, %c0_28] : memref<1x128xf32, #tpu.memory_space<vmem>>, vector<1x128xf32>
    %32 = vector.broadcast %31 : vector<1x128xf32> to vector<128x128xf32>
    %33 = arith.addf %30, %32 : vector<128x128xf32>
    %cst_29 = arith.constant 0.000000e+00 : f32
    %34 = vector.broadcast %cst_29 : f32 to vector<128x128xf32>
    %35 = arith.maximumf %33, %34 : vector<128x128xf32>
    %36 = arith.truncf %35 : vector<128x128xf32> to vector<128x128xbf16>
    %c0_30 = arith.constant 0 : index
    %c0_31 = arith.constant 0 : index
    %37 = vector.load %arg23[%c0_30, %c0_31] : memref<128x128xbf16, #tpu.memory_space<vmem>>, vector<128x128xbf16>
    %cst_32 = arith.constant dense<0.000000e+00> : vector<128x128xf32>
    %38 = tpu.matmul %36, %37, %cst_32 {dimension_numbers = #tpu.dot_dimension_numbers<[1], [0], [0], [1], [0, 0, 1, 1], [], []>} : vector<128x128xbf16>, vector<128x128xbf16>, vector<128x128xf32> -> vector<128x128xf32>
    %c0_33 = arith.constant 0 : index
    %c0_34 = arith.constant 0 : index
    %39 = vector.load %arg24[%c0_33, %c0_34] : memref<1x128xf32, #tpu.memory_space<vmem>>, vector<1x128xf32>
    %40 = vector.broadcast %39 : vector<1x128xf32> to vector<128x128xf32>
    %41 = arith.addf %38, %40 : vector<128x128xf32>
    %c0_35 = arith.constant 0 : index
    %c0_36 = arith.constant 0 : index
    %42 = vector.load %arg4[%c0_35, %c0_36] : memref<128x128xbf16, #tpu.memory_space<vmem>>, vector<128x128xbf16>
    %43 = arith.truncf %41 : vector<128x128xf32> to vector<128x128xbf16>
    %cst_37 = arith.constant dense<0.000000e+00> : vector<128x128xf32>
    %44 = tpu.matmul %42, %43, %cst_37 {dimension_numbers = #tpu.dot_dimension_numbers<[1], [0], [0], [1], [0, 0, 1, 1], [], []>} : vector<128x128xbf16>, vector<128x128xbf16>, vector<128x128xf32> -> vector<128x128xf32>
    %45 = arith.addf %27, %44 : vector<128x128xf32>
    %c0_38 = arith.constant 0 : index
    %c0_39 = arith.constant 0 : index
    %46 = vector.load %arg0[%c0_38, %c0_39] : memref<16x128xbf16, #tpu.memory_space<vmem>>, vector<16x128xbf16>
    %c0_40 = arith.constant 0 : index
    %c0_41 = arith.constant 0 : index
    %47 = vector.load %arg5[%c0_40, %c0_41] : memref<128x128xbf16, #tpu.memory_space<vmem>>, vector<128x128xbf16>
    %cst_42 = arith.constant dense<0.000000e+00> : vector<16x128xf32>
    %48 = tpu.matmul %46, %47, %cst_42 {dimension_numbers = #tpu.dot_dimension_numbers<[1], [0], [0], [1], [0, 0, 1, 1], [], []>} : vector<16x128xbf16>, vector<128x128xbf16>, vector<16x128xf32> -> vector<16x128xf32>
    %c0_43 = arith.constant 0 : index
    %c0_44 = arith.constant 0 : index
    %49 = vector.load %arg6[%c0_43, %c0_44] : memref<1x128xf32, #tpu.memory_space<vmem>>, vector<1x128xf32>
    %50 = vector.broadcast %49 : vector<1x128xf32> to vector<16x128xf32>
    %51 = arith.addf %48, %50 : vector<16x128xf32>
    %cst_45 = arith.constant 0.000000e+00 : f32
    %52 = vector.broadcast %cst_45 : f32 to vector<16x128xf32>
    %53 = arith.maximumf %51, %52 : vector<16x128xf32>
    %54 = arith.truncf %53 : vector<16x128xf32> to vector<16x128xbf16>
    %c0_46 = arith.constant 0 : index
    %c0_47 = arith.constant 0 : index
    %55 = vector.load %arg7[%c0_46, %c0_47] : memref<128x128xbf16, #tpu.memory_space<vmem>>, vector<128x128xbf16>
    %cst_48 = arith.constant dense<0.000000e+00> : vector<16x128xf32>
    %56 = tpu.matmul %54, %55, %cst_48 {dimension_numbers = #tpu.dot_dimension_numbers<[1], [0], [0], [1], [0, 0, 1, 1], [], []>} : vector<16x128xbf16>, vector<128x128xbf16>, vector<16x128xf32> -> vector<16x128xf32>
    %c0_49 = arith.constant 0 : index
    %c0_50 = arith.constant 0 : index
    %57 = vector.load %arg8[%c0_49, %c0_50] : memref<1x128xf32, #tpu.memory_space<vmem>>, vector<1x128xf32>
    %58 = vector.broadcast %57 : vector<1x128xf32> to vector<16x128xf32>
    %59 = arith.addf %56, %58 : vector<16x128xf32>
    %60 = arith.truncf %45 : vector<128x128xf32> to vector<128x128xbf16>
    %c0_51 = arith.constant 0 : index
    %c0_52 = arith.constant 0 : index
    %61 = vector.load %arg17[%c0_51, %c0_52] : memref<128x128xbf16, #tpu.memory_space<vmem>>, vector<128x128xbf16>
    %cst_53 = arith.constant dense<0.000000e+00> : vector<128x128xf32>
    %62 = tpu.matmul %60, %61, %cst_53 {dimension_numbers = #tpu.dot_dimension_numbers<[1], [0], [0], [1], [0, 0, 1, 1], [], []>} : vector<128x128xbf16>, vector<128x128xbf16>, vector<128x128xf32> -> vector<128x128xf32>
    %c0_54 = arith.constant 0 : index
    %c0_55 = arith.constant 0 : index
    %63 = vector.load %arg18[%c0_54, %c0_55] : memref<1x128xf32, #tpu.memory_space<vmem>>, vector<1x128xf32>
    %64 = vector.broadcast %63 : vector<1x128xf32> to vector<128x128xf32>
    %65 = arith.addf %62, %64 : vector<128x128xf32>
    %cst_56 = arith.constant 0.000000e+00 : f32
    %66 = vector.broadcast %cst_56 : f32 to vector<128x128xf32>
    %67 = arith.maximumf %65, %66 : vector<128x128xf32>
    %68 = arith.truncf %67 : vector<128x128xf32> to vector<128x128xbf16>
    %c0_57 = arith.constant 0 : index
    %c0_58 = arith.constant 0 : index
    %69 = vector.load %arg19[%c0_57, %c0_58] : memref<128x128xbf16, #tpu.memory_space<vmem>>, vector<128x128xbf16>
    %cst_59 = arith.constant dense<0.000000e+00> : vector<128x128xf32>
    %70 = tpu.matmul %68, %69, %cst_59 {dimension_numbers = #tpu.dot_dimension_numbers<[1], [0], [0], [1], [0, 0, 1, 1], [], []>} : vector<128x128xbf16>, vector<128x128xbf16>, vector<128x128xf32> -> vector<128x128xf32>
    %c0_60 = arith.constant 0 : index
    %c0_61 = arith.constant 0 : index
    %71 = vector.load %arg20[%c0_60, %c0_61] : memref<1x128xf32, #tpu.memory_space<vmem>>, vector<1x128xf32>
    %72 = vector.broadcast %71 : vector<1x128xf32> to vector<128x128xf32>
    %73 = arith.addf %70, %72 : vector<128x128xf32>
    %c0_62 = arith.constant 0 : index
    %c0_63 = arith.constant 0 : index
    %74 = vector.load %arg3[%c0_62, %c0_63] : memref<16x128xbf16, #tpu.memory_space<vmem>>, vector<16x128xbf16>
    %75 = arith.truncf %73 : vector<128x128xf32> to vector<128x128xbf16>
    %cst_64 = arith.constant dense<0.000000e+00> : vector<16x128xf32>
    %76 = tpu.matmul %74, %75, %cst_64 {dimension_numbers = #tpu.dot_dimension_numbers<[1], [0], [0], [1], [0, 0, 1, 1], [], []>} : vector<16x128xbf16>, vector<128x128xbf16>, vector<16x128xf32> -> vector<16x128xf32>
    %77 = arith.addf %59, %76 : vector<16x128xf32>
    %c0_65 = arith.constant 0 : index
    %c0_66 = arith.constant 0 : index
    %78 = vector.load %arg25[%c0_65, %c0_66] : memref<16x128xf32, #tpu.memory_space<vmem>>, vector<16x128xf32>
    tpu.vector_store %arg25[%c0_65, %c0_66], %77 {strides = array<i32>} : memref<16x128xf32, #tpu.memory_space<vmem>>, vector<16x128xf32>,
    return
  }
}

</mosaic_0001>

<llo_original>
// kernel: tpu_custom_call.1
$region0: #{tpu_custom_call.1}
  #allocation0 [shape = 'u32[]', space=smem, size = 0x4, offset = 0x4, fixed_abs, tag = 'smem constant byte address 0x4 - core index']
  #allocation1 [shape = 'u32[144,128]{1,0:T(1,128)}', space=vmem, size = 0x12000, scoped, tag = 'internal scratch']
  %s0 = inlined_call_operand.hbm [shape: bf16[16,128], index: 0, kind: input, shape index: {}]
  %s1 = inlined_call_operand.hbm [shape: bf16[128,128], index: 1, kind: input, shape index: {}]
  %s2 = inlined_call_operand.hbm [shape: bf16[128,128], index: 2, kind: input, shape index: {}]
  %s3 = inlined_call_operand.hbm [shape: bf16[16,128], index: 3, kind: input, shape index: {}]
  %s4 = inlined_call_operand.hbm [shape: bf16[128,128], index: 4, kind: input, shape index: {}]
  %s5 = inlined_call_operand.hbm [shape: bf16[128,128], index: 5, kind: input, shape index: {}]
  %s6 = inlined_call_operand.hbm [shape: f32[1,128], index: 6, kind: input, shape index: {}]
  %s7 = inlined_call_operand.hbm [shape: bf16[128,128], index: 7, kind: input, shape index: {}]
  %s8 = inlined_call_operand.hbm [shape: f32[1,128], index: 8, kind: input, shape index: {}]
  %s9 = inlined_call_operand.hbm [shape: bf16[128,128], index: 9, kind: input, shape index: {}]
  %s10 = inlined_call_operand.hbm [shape: f32[1,128], index: 10, kind: input, shape index: {}]
  %s11 = inlined_call_operand.hbm [shape: bf16[128,128], index: 11, kind: input, shape index: {}]
  %s12 = inlined_call_operand.hbm [shape: f32[1,128], index: 12, kind: input, shape index: {}]
  %s13 = inlined_call_operand.hbm [shape: bf16[128,128], index: 13, kind: input, shape index: {}]
  %s14 = inlined_call_operand.hbm [shape: f32[1,128], index: 14, kind: input, shape index: {}]
  %s15 = inlined_call_operand.hbm [shape: bf16[128,128], index: 15, kind: input, shape index: {}]
  %s16 = inlined_call_operand.hbm [shape: f32[1,128], index: 16, kind: input, shape index: {}]
  %s17 = inlined_call_operand.vmem [shape: bf16[128,128], index: 17, kind: input, shape index: {}]
  %s18 = inlined_call_operand.vmem [shape: f32[1,128], index: 18, kind: input, shape index: {}]
  %s19 = inlined_call_operand.hbm [shape: bf16[128,128], index: 19, kind: input, shape index: {}]
  %s20 = inlined_call_operand.vmem [shape: f32[1,128], index: 20, kind: input, shape index: {}]
  %s21 = inlined_call_operand.hbm [shape: bf16[128,128], index: 21, kind: input, shape index: {}]
  %s22 = inlined_call_operand.vmem [shape: f32[1,128], index: 22, kind: input, shape index: {}]
  %s23 = inlined_call_operand.hbm [shape: bf16[128,128], index: 23, kind: input, shape index: {}]
  %s24 = inlined_call_operand.vmem [shape: f32[1,128], index: 24, kind: input, shape index: {}]
  %s25 = inlined_call_operand.hbm [shape: f32[16,128], index: 25, kind: output, shape index: {}]
  %s26 = sld [smem:[#allocation0]]
  $region190: #{tpu_custom_call.1} parent=0
    _
  %s28 = ssub.s32 1, %s26
  %s29 = scalar_select 0, %s28, %s26
  $region1: #{tpu_custom_call.1} parent=0
    #allocation2 [shape = 'u8[4096]{0}', space=vmem, size = 0x1000, scoped, tag = 'input window, operand 0, single buffered']
    #allocation3 [shape = 's32[1]{0}', space=sflag, size = 0x4, scoped, tag = 'scoped memory for tpu_custom_call.1']
    #allocation4 [shape = 's32[1]{0}', space=sflag, size = 0x4, scoped, tag = 'scoped memory for tpu_custom_call.1']
    #allocation5 [shape = 'u8[32768]{0}', space=vmem, size = 0x8000, scoped, tag = 'input window, operand 1, single buffered']
    #allocation6 [shape = 's32[1]{0}', space=sflag, size = 0x4, scoped, tag = 'scoped memory for tpu_custom_call.1']
    #allocation7 [shape = 'u8[32768]{0}', space=vmem, size = 0x8000, scoped, tag = 'input window, operand 2, single buffered']
    #allocation8 [shape = 'u8[4096]{0}', space=vmem, size = 0x1000, scoped, tag = 'input window, operand 3, single buffered']
    #allocation9 [shape = 's32[1]{0}', space=sflag, size = 0x4, scoped, tag = 'scoped memory for tpu_custom_call.1']
    #allocation10 [shape = 'u8[32768]{0}', space=vmem, size = 0x8000, scoped, tag = 'input window, operand 4, single buffered']
    #allocation11 [shape = 'u8[32768]{0}', space=vmem, size = 0x8000, scoped, tag = 'input window, operand 5, single buffered']
    #allocation12 [shape = 's32[1]{0}', space=sflag, size = 0x4, scoped, tag = 'scoped memory for tpu_custom_call.1']
    #allocation13 [shape = 'u8[512]{0}', space=vmem, size = 0x400, scoped, tag = 'input window, operand 6, single buffered']
    #allocation14 [shape = 'u8[32768]{0}', space=vmem, size = 0x8000, scoped, tag = 'input window, operand 7, single buffered']
    #allocation15 [shape = 's32[1]{0}', space=sflag, size = 0x4, scoped, tag = 'scoped memory for tpu_custom_call.1']
    #allocation16 [shape = 'u8[512]{0}', space=vmem, size = 0x400, scoped, tag = 'input window, operand 8, single buffered']
    #allocation17 [shape = 'u8[32768]{0}', space=vmem, size = 0x8000, scoped, tag = 'input window, operand 9, single buffered']
    #allocation18 [shape = 's32[1]{0}', space=sflag, size = 0x4, scoped, tag = 'scoped memory for tpu_custom_call.1']
    #allocation19 [shape = 'u8[512]{0}', space=vmem, size = 0x400, scoped, tag = 'input window, operand 10, single buffered']
    #allocation20 [shape = 'u8[32768]{0}', space=vmem, size = 0x8000, scoped, tag = 'input window, operand 11, single buffered']
    #allocation21 [shape = 's32[1]{0}', space=sflag, size = 0x4, scoped, tag = 'scoped memory for tpu_custom_call.1']
    #allocation22 [shape = 'u8[512]{0}', space=vmem, size = 0x400, scoped, tag = 'input window, operand 12, single buffered']
    #allocation23 [shape = 'u8[32768]{0}', space=vmem, size = 0x8000, scoped, tag = 'input window, operand 13, single buffered']
    #allocation24 [shape = 's32[1]{0}', space=sflag, size = 0x4, scoped, tag = 'scoped memory for tpu_custom_call.1']
    #allocation25 [shape = 'u8[512]{0}', space=vmem, size = 0x400, scoped, tag = 'input window, operand 14, single buffered']
    #allocation26 [shape = 'u8[32768]{0}', space=vmem, size = 0x8000, scoped, tag = 'input window, operand 15, single buffered']
    #allocation27 [shape = 's32[1]{0}', space=sflag, size = 0x4, scoped, tag = 'scoped memory for tpu_custom_call.1']
    #allocation28 [shape = 'u8[512]{0}', space=vmem, size = 0x400, scoped, tag = 'input window, operand 16, single buffered']
    #allocation29 [shape = 'u8[32768]{0}', space=vmem, size = 0x8000, scoped, tag = 'input window, operand 19, single buffered']
    #allocation30 [shape = 's32[1]{0}', space=sflag, size = 0x4, scoped, tag = 'scoped memory for tpu_custom_call.1']
    #allocation31 [shape = 'u8[32768]{0}', space=vmem, size = 0x8000, scoped, tag = 'input window, operand 21, single buffered']
    #allocation32 [shape = 'u8[32768]{0}', space=vmem, size = 0x8000, scoped, tag = 'input window, operand 23, single buffered']
    #allocation33 [shape = 's32[1]{0}', space=sflag, size = 0x4, scoped, tag = 'scoped memory for tpu_custom_call.1']
    #allocation34 [shape = 'u8[8192]{0}', space=vmem, size = 0x2000, scoped, tag = 'output window, operand 0, single buffered']
    %30 = vsyncpa [#allocation3], 0
    %31 = vsyncpa [#allocation6], 0
    %32 = vsyncpa [#allocation9], 0
    %33 = vsyncpa [#allocation12], 0
    %34 = vsyncpa [#allocation15], 0
    %35 = vsyncpa [#allocation18], 0
    %36 = vsyncpa [#allocation21], 0
    %37 = vsyncpa [#allocation24], 0
    %38 = vsyncpa [#allocation27], 0
    %39 = vsyncpa [#allocation30], 0
    %40 = vsyncpa [#allocation33], 0
    %41 = vsyncpa [#allocation4], 0
    // Predicated region
    $region2: #{tpu_custom_call.1} parent=1 // pred_check
      _
    $region3: #{tpu_custom_call.1} parent=1 // pred_check_branch
      %43 = sbr.rel (0) target = $region5
    $region4: #{tpu_custom_call.1} parent=1 // pred_region
      %s45 = ssub.s32 128, 128
      %46 = vsyncadd [#allocation3], %s45
      %s47 = sshll.u32 [#allocation2], 4
      %s48 = int_to_ptr.vmem [resolvable:$true] %s47
      %53 = dma.hbm_to_vmem [thread:$0]  %s0, 128, %s48, [#allocation3], 64, 64, 4
    $region5: #{tpu_custom_call.1} parent=1 // pred_fallthru
      _
    // Predicated region
    $region6: #{tpu_custom_call.1} parent=1 // pred_check
      _
    $region7: #{tpu_custom_call.1} parent=1 // pred_check_branch
      %55 = sbr.rel (0) target = $region9
    $region8: #{tpu_custom_call.1} parent=1 // pred_region
      %s57 = ssub.s32 1024, 1024
      %58 = vsyncadd [#allocation6], %s57
      %s59 = sshll.u32 [#allocation5], 4
      %s60 = int_to_ptr.vmem [resolvable:$true] %s59
      %65 = dma.hbm_to_vmem [thread:$0]  %s1, 1024, %s60, [#allocation6], 64, 64, 4
    $region9: #{tpu_custom_call.1} parent=1 // pred_fallthru
      _
    // Predicated region
    $region10: #{tpu_custom_call.1} parent=1 // pred_check
      _
    $region11: #{tpu_custom_call.1} parent=1 // pred_check_branch
      %67 = sbr.rel (0) target = $region13
    $region12: #{tpu_custom_call.1} parent=1 // pred_region
      %s69 = ssub.s32 1024, 1024
      %70 = vsyncadd [#allocation6], %s69
      %s71 = sshll.u32 [#allocation7], 4
      %s72 = int_to_ptr.vmem [resolvable:$true] %s71
      %77 = dma.hbm_to_vmem [thread:$0]  %s2, 1024, %s72, [#allocation6], 64, 64, 4
    $region13: #{tpu_custom_call.1} parent=1 // pred_fallthru
      _
    // Predicated region
    $region14: #{tpu_custom_call.1} parent=1 // pred_check
      _
    $region15: #{tpu_custom_call.1} parent=1 // pred_check_branch
      %79 = sbr.rel (0) target = $region17
    $region16: #{tpu_custom_call.1} parent=1 // pred_region
      %s81 = ssub.s32 128, 128
      %82 = vsyncadd [#allocation9], %s81
      %s83 = sshll.u32 [#allocation8], 4
      %s84 = int_to_ptr.vmem [resolvable:$true] %s83
      %89 = dma.hbm_to_vmem [thread:$0]  %s3, 128, %s84, [#allocation9], 64, 64, 4
    $region17: #{tpu_custom_call.1} parent=1 // pred_fallthru
      _
    // Predicated region
    $region18: #{tpu_custom_call.1} parent=1 // pred_check
      _
    $region19: #{tpu_custom_call.1} parent=1 // pred_check_branch
      %91 = sbr.rel (0) target = $region21
    $region20: #{tpu_custom_call.1} parent=1 // pred_region
      %s93 = ssub.s32 1024, 1024
      %94 = vsyncadd [#allocation9], %s93
      %s95 = sshll.u32 [#allocation10], 4
      %s96 = int_to_ptr.vmem [resolvable:$true] %s95
      %101 = dma.hbm_to_vmem [thread:$0]  %s4, 1024, %s96, [#allocation9], 64, 64, 4
    $region21: #{tpu_custom_call.1} parent=1 // pred_fallthru
      _
    // Predicated region
    $region22: #{tpu_custom_call.1} parent=1 // pred_check
      _
    $region23: #{tpu_custom_call.1} parent=1 // pred_check_branch
      %103 = sbr.rel (0) target = $region25
    $region24: #{tpu_custom_call.1} parent=1 // pred_region
      %s105 = ssub.s32 1024, 1024
      %106 = vsyncadd [#allocation12], %s105
      %s107 = sshll.u32 [#allocation11], 4
      %s108 = int_to_ptr.vmem [resolvable:$true] %s107
      %113 = dma.hbm_to_vmem [thread:$0]  %s5, 1024, %s108, [#allocation12], 64, 64, 4
    $region25: #{tpu_custom_call.1} parent=1 // pred_fallthru
      _
    // Predicated region
    $region26: #{tpu_custom_call.1} parent=1 // pred_check
      _
    $region27: #{tpu_custom_call.1} parent=1 // pred_check_branch
      %115 = sbr.rel (0) target = $region29
    $region28: #{tpu_custom_call.1} parent=1 // pred_region
      %s117 = ssub.s32 16, 16
      %118 = vsyncadd [#allocation12], %s117
      %s120 = sshll.u32 [#allocation13], 4
      %s121 = int_to_ptr.vmem [resolvable:$true] %s120
      %123 = dma.hbm_to_vmem [thread:$0]  %s6, 16, %s121, [#allocation12]
    $region29: #{tpu_custom_call.1} parent=1 // pred_fallthru
      _
    // Predicated region
    $region30: #{tpu_custom_call.1} parent=1 // pred_check
      _
    $region31: #{tpu_custom_call.1} parent=1 // pred_check_branch
      %125 = sbr.rel (0) target = $region33
    $region32: #{tpu_custom_call.1} parent=1 // pred_region
      %s127 = ssub.s32 1024, 1024
      %128 = vsyncadd [#allocation15], %s127
      %s129 = sshll.u32 [#allocation14], 4
      %s130 = int_to_ptr.vmem [resolvable:$true] %s129
      %135 = dma.hbm_to_vmem [thread:$0]  %s7, 1024, %s130, [#allocation15], 64, 64, 4
    $region33: #{tpu_custom_call.1} parent=1 // pred_fallthru
      _
    // Predicated region
    $region34: #{tpu_custom_call.1} parent=1 // pred_check
      _
    $region35: #{tpu_custom_call.1} parent=1 // pred_check_branch
      %137 = sbr.rel (0) target = $region37
    $region36: #{tpu_custom_call.1} parent=1 // pred_region
      %s139 = ssub.s32 16, 16
      %140 = vsyncadd [#allocation15], %s139
      %s142 = sshll.u32 [#allocation16], 4
      %s143 = int_to_ptr.vmem [resolvable:$true] %s142
      %145 = dma.hbm_to_vmem [thread:$0]  %s8, 16, %s143, [#allocation15]
    $region37: #{tpu_custom_call.1} parent=1 // pred_fallthru
      _
    // Predicated region
    $region38: #{tpu_custom_call.1} parent=1 // pred_check
      _
    $region39: #{tpu_custom_call.1} parent=1 // pred_check_branch
      %147 = sbr.rel (0) target = $region41
    $region40: #{tpu_custom_call.1} parent=1 // pred_region
      %s149 = ssub.s32 1024, 1024
      %150 = vsyncadd [#allocation18], %s149
      %s151 = sshll.u32 [#allocation17], 4
      %s152 = int_to_ptr.vmem [resolvable:$true] %s151
      %157 = dma.hbm_to_vmem [thread:$0]  %s9, 1024, %s152, [#allocation18], 64, 64, 4
    $region41: #{tpu_custom_call.1} parent=1 // pred_fallthru
      _
    // Predicated region
    $region42: #{tpu_custom_call.1} parent=1 // pred_check
      _
    $region43: #{tpu_custom_call.1} parent=1 // pred_check_branch
      %159 = sbr.rel (0) target = $region45
    $region44: #{tpu_custom_call.1} parent=1 // pred_region
      %s161 = ssub.s32 16, 16
      %162 = vsyncadd [#allocation18], %s161
      %s164 = sshll.u32 [#allocation19], 4
      %s165 = int_to_ptr.vmem [resolvable:$true] %s164
      %167 = dma.hbm_to_vmem [thread:$0]  %s10, 16, %s165, [#allocation18]
    $region45: #{tpu_custom_call.1} parent=1 // pred_fallthru
      _
    // Predicated region
    $region46: #{tpu_custom_call.1} parent=1 // pred_check
      _
    $region47: #{tpu_custom_call.1} parent=1 // pred_check_branch
      %169 = sbr.rel (0) target = $region49
    $region48: #{tpu_custom_call.1} parent=1 // pred_region
      %s171 = ssub.s32 1024, 1024
      %172 = vsyncadd [#allocation21], %s171
      %s173 = sshll.u32 [#allocation20], 4
      %s174 = int_to_ptr.vmem [resolvable:$true] %s173
      %179 = dma.hbm_to_vmem [thread:$0]  %s11, 1024, %s174, [#allocation21], 64, 64, 4
    $region49: #{tpu_custom_call.1} parent=1 // pred_fallthru
      _
    // Predicated region
    $region50: #{tpu_custom_call.1} parent=1 // pred_check
      _
    $region51: #{tpu_custom_call.1} parent=1 // pred_check_branch
      %181 = sbr.rel (0) target = $region53
    $region52: #{tpu_custom_call.1} parent=1 // pred_region
      %s183 = ssub.s32 16, 16
      %184 = vsyncadd [#allocation21], %s183
      %s186 = sshll.u32 [#allocation22], 4
      %s187 = int_to_ptr.vmem [resolvable:$true] %s186
      %189 = dma.hbm_to_vmem [thread:$0]  %s12, 16, %s187, [#allocation21]
    $region53: #{tpu_custom_call.1} parent=1 // pred_fallthru
      _
    // Predicated region
    $region54: #{tpu_custom_call.1} parent=1 // pred_check
      _
    $region55: #{tpu_custom_call.1} parent=1 // pred_check_branch
      %191 = sbr.rel (0) target = $region57
    $region56: #{tpu_custom_call.1} parent=1 // pred_region
      %s193 = ssub.s32 1024, 1024
      %194 = vsyncadd [#allocation24], %s193
      %s195 = sshll.u32 [#allocation23], 4
      %s196 = int_to_ptr.vmem [resolvable:$true] %s195
      %201 = dma.hbm_to_vmem [thread:$0]  %s13, 1024, %s196, [#allocation24], 64, 64, 4
    $region57: #{tpu_custom_call.1} parent=1 // pred_fallthru
      _
    // Predicated region
    $region58: #{tpu_custom_call.1} parent=1 // pred_check
      _
    $region59: #{tpu_custom_call.1} parent=1 // pred_check_branch
      %203 = sbr.rel (0) target = $region61
    $region60: #{tpu_custom_call.1} parent=1 // pred_region
      %s205 = ssub.s32 16, 16
      %206 = vsyncadd [#allocation24], %s205
      %s208 = sshll.u32 [#allocation25], 4
      %s209 = int_to_ptr.vmem [resolvable:$true] %s208
      %211 = dma.hbm_to_vmem [thread:$0]  %s14, 16, %s209, [#allocation24]
    $region61: #{tpu_custom_call.1} parent=1 // pred_fallthru
      _
    // Predicated region
    $region62: #{tpu_custom_call.1} parent=1 // pred_check
      _
    $region63: #{tpu_custom_call.1} parent=1 // pred_check_branch
      %213 = sbr.rel (0) target = $region65
    $region64: #{tpu_custom_call.1} parent=1 // pred_region
      %s215 = ssub.s32 1024, 1024
      %216 = vsyncadd [#allocation27], %s215
      %s217 = sshll.u32 [#allocation26], 4
      %s218 = int_to_ptr.vmem [resolvable:$true] %s217
      %223 = dma.hbm_to_vmem [thread:$0]  %s15, 1024, %s218, [#allocation27], 64, 64, 4
    $region65: #{tpu_custom_call.1} parent=1 // pred_fallthru
      _
    // Predicated region
    $region66: #{tpu_custom_call.1} parent=1 // pred_check
      _
    $region67: #{tpu_custom_call.1} parent=1 // pred_check_branch
      %225 = sbr.rel (0) target = $region69
    $region68: #{tpu_custom_call.1} parent=1 // pred_region
      %s227 = ssub.s32 16, 16
      %228 = vsyncadd [#allocation27], %s227
      %s230 = sshll.u32 [#allocation28], 4
      %s231 = int_to_ptr.vmem [resolvable:$true] %s230
      %233 = dma.hbm_to_vmem [thread:$0]  %s16, 16, %s231, [#allocation27]
    $region69: #{tpu_custom_call.1} parent=1 // pred_fallthru
      _
    // Predicated region
    $region70: #{tpu_custom_call.1} parent=1 // pred_check
      _
    $region71: #{tpu_custom_call.1} parent=1 // pred_check_branch
      %235 = sbr.rel (0) target = $region73
    $region72: #{tpu_custom_call.1} parent=1 // pred_region
      _
    $region73: #{tpu_custom_call.1} parent=1 // pred_fallthru
      _
    // Predicated region
    $region74: #{tpu_custom_call.1} parent=1 // pred_check
      _
    $region75: #{tpu_custom_call.1} parent=1 // pred_check_branch
      %237 = sbr.rel (0) target = $region77
    $region76: #{tpu_custom_call.1} parent=1 // pred_region
      _
    $region77: #{tpu_custom_call.1} parent=1 // pred_fallthru
      _
    // Predicated region
    $region78: #{tpu_custom_call.1} parent=1 // pred_check
      _
    $region79: #{tpu_custom_call.1} parent=1 // pred_check_branch
      %239 = sbr.rel (0) target = $region81
    $region80: #{tpu_custom_call.1} parent=1 // pred_region
      %s241 = ssub.s32 1024, 1024
      %242 = vsyncadd [#allocation30], %s241
      %s243 = sshll.u32 [#allocation29], 4
      %s244 = int_to_ptr.vmem [resolvable:$true] %s243
      %249 = dma.hbm_to_vmem [thread:$0]  %s19, 1024, %s244, [#allocation30], 64, 64, 4
    $region81: #{tpu_custom_call.1} parent=1 // pred_fallthru
      _
    // Predicated region
    $region82: #{tpu_custom_call.1} parent=1 // pred_check
      _
    $region83: #{tpu_custom_call.1} parent=1 // pred_check_branch
      %251 = sbr.rel (0) target = $region85
    $region84: #{tpu_custom_call.1} parent=1 // pred_region
      _
    $region85: #{tpu_custom_call.1} parent=1 // pred_fallthru
      _
    // Predicated region
    $region86: #{tpu_custom_call.1} parent=1 // pred_check
      _
    $region87: #{tpu_custom_call.1} parent=1 // pred_check_branch
      %253 = sbr.rel (0) target = $region89
    $region88: #{tpu_custom_call.1} parent=1 // pred_region
      %s255 = ssub.s32 1024, 1024
      %256 = vsyncadd [#allocation30], %s255
      %s257 = sshll.u32 [#allocation31], 4
      %s258 = int_to_ptr.vmem [resolvable:$true] %s257
      %263 = dma.hbm_to_vmem [thread:$0]  %s21, 1024, %s258, [#allocation30], 64, 64, 4
    $region89: #{tpu_custom_call.1} parent=1 // pred_fallthru
      _
    // Predicated region
    $region90: #{tpu_custom_call.1} parent=1 // pred_check
      _
    $region91: #{tpu_custom_call.1} parent=1 // pred_check_branch
      %265 = sbr.rel (0) target = $region93
    $region92: #{tpu_custom_call.1} parent=1 // pred_region
      _
    $region93: #{tpu_custom_call.1} parent=1 // pred_fallthru
      _
    // Predicated region
    $region94: #{tpu_custom_call.1} parent=1 // pred_check
      _
    $region95: #{tpu_custom_call.1} parent=1 // pred_check_branch
      %267 = sbr.rel (0) target = $region97
    $region96: #{tpu_custom_call.1} parent=1 // pred_region
      %s269 = ssub.s32 1024, 1024
      %270 = vsyncadd [#allocation33], %s269
      %s271 = sshll.u32 [#allocation32], 4
      %s272 = int_to_ptr.vmem [resolvable:$true] %s271
      %277 = dma.hbm_to_vmem [thread:$0]  %s23, 1024, %s272, [#allocation33], 64, 64, 4
    $region97: #{tpu_custom_call.1} parent=1 // pred_fallthru
      _
    // Predicated region
    $region98: #{tpu_custom_call.1} parent=1 // pred_check
      _
    $region99: #{tpu_custom_call.1} parent=1 // pred_check_branch
      %279 = sbr.rel (0) target = $region101
    $region100: #{tpu_custom_call.1} parent=1 // pred_region
      _
    $region101: #{tpu_custom_call.1} parent=1 // pred_fallthru
      _
    // Predicated region
    $region102: #{tpu_custom_call.1} parent=1 // pred_check
      _
    $region103: #{tpu_custom_call.1} parent=1 // pred_check_branch
      %281 = sbr.rel (0) target = $region105
    $region104: #{tpu_custom_call.1} parent=1 // pred_region
      %282 = dma.done [#allocation3], 128
    $region105: #{tpu_custom_call.1} parent=1 // pred_fallthru
      _
    // Predicated region
    $region106: #{tpu_custom_call.1} parent=1 // pred_check
      _
    $region107: #{tpu_custom_call.1} parent=1 // pred_check_branch
      %284 = sbr.rel (0) target = $region109
    $region108: #{tpu_custom_call.1} parent=1 // pred_region
      %285 = dma.done [#allocation6], 1024
    $region109: #{tpu_custom_call.1} parent=1 // pred_fallthru
      _
    // Predicated region
    $region110: #{tpu_custom_call.1} parent=1 // pred_check
      _
    $region111: #{tpu_custom_call.1} parent=1 // pred_check_branch
      %287 = sbr.rel (0) target = $region113
    $region112: #{tpu_custom_call.1} parent=1 // pred_region
      %288 = dma.done [#allocation6], 1024
    $region113: #{tpu_custom_call.1} parent=1 // pred_fallthru
      _
    // Predicated region
    $region114: #{tpu_custom_call.1} parent=1 // pred_check
      _
    $region115: #{tpu_custom_call.1} parent=1 // pred_check_branch
      %290 = sbr.rel (0) target = $region117
    $region116: #{tpu_custom_call.1} parent=1 // pred_region
      %291 = dma.done [#allocation9], 128
    $region117: #{tpu_custom_call.1} parent=1 // pred_fallthru
      _
    // Predicated region
    $region118: #{tpu_custom_call.1} parent=1 // pred_check
      _
    $region119: #{tpu_custom_call.1} parent=1 // pred_check_branch
      %293 = sbr.rel (0) target = $region121
    $region120: #{tpu_custom_call.1} parent=1 // pred_region
      %294 = dma.done [#allocation9], 1024
    $region121: #{tpu_custom_call.1} parent=1 // pred_fallthru
      _
    // Predicated region
    $region122: #{tpu_custom_call.1} parent=1 // pred_check
      _
    $region123: #{tpu_custom_call.1} parent=1 // pred_check_branch
      %296 = sbr.rel (0) target = $region125
    $region124: #{tpu_custom_call.1} parent=1 // pred_region
      %297 = dma.done [#allocation12], 1024
    $region125: #{tpu_custom_call.1} parent=1 // pred_fallthru
      _
    // Predicated region
    $region126: #{tpu_custom_call.1} parent=1 // pred_check
      _
    $region127: #{tpu_custom_call.1} parent=1 // pred_check_branch
      %299 = sbr.rel (0) target = $region129
    $region128: #{tpu_custom_call.1} parent=1 // pred_region
      %300 = dma.done [#allocation12], 16
    $region129: #{tpu_custom_call.1} parent=1 // pred_fallthru
      _
    // Predicated region
    $region130: #{tpu_custom_call.1} parent=1 // pred_check
      _
    $region131: #{tpu_custom_call.1} parent=1 // pred_check_branch
      %302 = sbr.rel (0) target = $region133
    $region132: #{tpu_custom_call.1} parent=1 // pred_region
      %303 = dma.done [#allocation15], 1024
    $region133: #{tpu_custom_call.1} parent=1 // pred_fallthru
      _
    // Predicated region
    $region134: #{tpu_custom_call.1} parent=1 // pred_check
      _
    $region135: #{tpu_custom_call.1} parent=1 // pred_check_branch
      %305 = sbr.rel (0) target = $region137
    $region136: #{tpu_custom_call.1} parent=1 // pred_region
      %306 = dma.done [#allocation15], 16
    $region137: #{tpu_custom_call.1} parent=1 // pred_fallthru
      _
    // Predicated region
    $region138: #{tpu_custom_call.1} parent=1 // pred_check
      _
    $region139: #{tpu_custom_call.1} parent=1 // pred_check_branch
      %308 = sbr.rel (0) target = $region141
    $region140: #{tpu_custom_call.1} parent=1 // pred_region
      %309 = dma.done [#allocation18], 1024
    $region141: #{tpu_custom_call.1} parent=1 // pred_fallthru
      _
    // Predicated region
    $region142: #{tpu_custom_call.1} parent=1 // pred_check
      _
    $region143: #{tpu_custom_call.1} parent=1 // pred_check_branch
      %311 = sbr.rel (0) target = $region145
    $region144: #{tpu_custom_call.1} parent=1 // pred_region
      %312 = dma.done [#allocation18], 16
    $region145: #{tpu_custom_call.1} parent=1 // pred_fallthru
      _
    // Predicated region
    $region146: #{tpu_custom_call.1} parent=1 // pred_check
      _
    $region147: #{tpu_custom_call.1} parent=1 // pred_check_branch
      %314 = sbr.rel (0) target = $region149
    $region148: #{tpu_custom_call.1} parent=1 // pred_region
      %315 = dma.done [#allocation21], 1024
    $region149: #{tpu_custom_call.1} parent=1 // pred_fallthru
      _
    // Predicated region
    $region150: #{tpu_custom_call.1} parent=1 // pred_check
      _
    $region151: #{tpu_custom_call.1} parent=1 // pred_check_branch
      %317 = sbr.rel (0) target = $region153
    $region152: #{tpu_custom_call.1} parent=1 // pred_region
      %318 = dma.done [#allocation21], 16
    $region153: #{tpu_custom_call.1} parent=1 // pred_fallthru
      _
    // Predicated region
    $region154: #{tpu_custom_call.1} parent=1 // pred_check
      _
    $region155: #{tpu_custom_call.1} parent=1 // pred_check_branch
      %320 = sbr.rel (0) target = $region157
    $region156: #{tpu_custom_call.1} parent=1 // pred_region
      %321 = dma.done [#allocation24], 1024
    $region157: #{tpu_custom_call.1} parent=1 // pred_fallthru
      _
    // Predicated region
    $region158: #{tpu_custom_call.1} parent=1 // pred_check
      _
    $region159: #{tpu_custom_call.1} parent=1 // pred_check_branch
      %323 = sbr.rel (0) target = $region161
    $region160: #{tpu_custom_call.1} parent=1 // pred_region
      %324 = dma.done [#allocation24], 16
    $region161: #{tpu_custom_call.1} parent=1 // pred_fallthru
      _
    // Predicated region
    $region162: #{tpu_custom_call.1} parent=1 // pred_check
      _
    $region163: #{tpu_custom_call.1} parent=1 // pred_check_branch
      %326 = sbr.rel (0) target = $region165
    $region164: #{tpu_custom_call.1} parent=1 // pred_region
      %327 = dma.done [#allocation27], 1024
    $region165: #{tpu_custom_call.1} parent=1 // pred_fallthru
      _
    // Predicated region
    $region166: #{tpu_custom_call.1} parent=1 // pred_check
      _
    $region167: #{tpu_custom_call.1} parent=1 // pred_check_branch
      %329 = sbr.rel (0) target = $region169
    $region168: #{tpu_custom_call.1} parent=1 // pred_region
      %330 = dma.done [#allocation27], 16
    $region169: #{tpu_custom_call.1} parent=1 // pred_fallthru
      _
    // Predicated region
    $region170: #{tpu_custom_call.1} parent=1 // pred_check
      _
    $region171: #{tpu_custom_call.1} parent=1 // pred_check_branch
      %332 = sbr.rel (0) target = $region173
    $region172: #{tpu_custom_call.1} parent=1 // pred_region
      %333 = dma.done [#allocation30], 1024
    $region173: #{tpu_custom_call.1} parent=1 // pred_fallthru
      _
    // Predicated region
    $region174: #{tpu_custom_call.1} parent=1 // pred_check
      _
    $region175: #{tpu_custom_call.1} parent=1 // pred_check_branch
      %335 = sbr.rel (0) target = $region177
    $region176: #{tpu_custom_call.1} parent=1 // pred_region
      %336 = dma.done [#allocation30], 1024
    $region177: #{tpu_custom_call.1} parent=1 // pred_fallthru
      _
    // Predicated region
    $region178: #{tpu_custom_call.1} parent=1 // pred_check
      _
    $region179: #{tpu_custom_call.1} parent=1 // pred_check_branch
      %338 = sbr.rel (0) target = $region181
    $region180: #{tpu_custom_call.1} parent=1 // pred_region
      %339 = dma.done [#allocation33], 1024
    $region181: #{tpu_custom_call.1} parent=1 // pred_fallthru
      _
    %v341 = vld [vmem:[#allocation7] sm:$0xf]
    %v342 = vld [vmem:[#allocation7 + $0x4] sm:$0xf]
    %v343 = vld [vmem:[#allocation7 + $0x8] sm:$0xf]
    %v344 = vld [vmem:[#allocation7 + $0xc] sm:$0xf]
    %v345 = vld [vmem:[#allocation7 + $0x10] sm:$0xf]
    %v346 = vld [vmem:[#allocation7 + $0x14] sm:$0xf]
    %v347 = vld [vmem:[#allocation7 + $0x18] sm:$0xf]
    %v348 = vld [vmem:[#allocation7 + $0x1c] sm:$0xf]
    %v349 = vld [vmem:[#allocation7 + $0x20] sm:$0xf]
    %v350 = vld [vmem:[#allocation7 + $0x24] sm:$0xf]
    %v351 = vld [vmem:[#allocation7 + $0x28] sm:$0xf]
    %v352 = vld [vmem:[#allocation7 + $0x2c] sm:$0xf]
    %v353 = vld [vmem:[#allocation7 + $0x30] sm:$0xf]
    %v354 = vld [vmem:[#allocation7 + $0x34] sm:$0xf]
    %v355 = vld [vmem:[#allocation7 + $0x38] sm:$0xf]
    %v356 = vld [vmem:[#allocation7 + $0x3c] sm:$0xf]
    %v357 = vld [vmem:[#allocation23] sm:$0xf]
    %v358 = vld [vmem:[#allocation23 + $0x4] sm:$0xf]
    %v359 = vld [vmem:[#allocation23 + $0x8] sm:$0xf]
    %v360 = vld [vmem:[#allocation23 + $0xc] sm:$0xf]
    %v361 = vld [vmem:[#allocation23 + $0x10] sm:$0xf]
    %v362 = vld [vmem:[#allocation23 + $0x14] sm:$0xf]
    %v363 = vld [vmem:[#allocation23 + $0x18] sm:$0xf]
    %v364 = vld [vmem:[#allocation23 + $0x1c] sm:$0xf]
    %v365 = vld [vmem:[#allocation23 + $0x20] sm:$0xf]
    %v366 = vld [vmem:[#allocation23 + $0x24] sm:$0xf]
    %v367 = vld [vmem:[#allocation23 + $0x28] sm:$0xf]
    %v368 = vld [vmem:[#allocation23 + $0x2c] sm:$0xf]
    %v369 = vld [vmem:[#allocation23 + $0x30] sm:$0xf]
    %v370 = vld [vmem:[#allocation23 + $0x34] sm:$0xf]
    %v371 = vld [vmem:[#allocation23 + $0x38] sm:$0xf]
    %v372 = vld [vmem:[#allocation23 + $0x3c] sm:$0xf]
    %v373 = vld [vmem:[#allocation25] sm:$0x1]
    %v375 = vlaneseq
    %v376 = vshrl.u32 %v375, 7
    %v377 = vsub.s32 0, %v376
    %v378 = vrot.slane %v373, %v377
    %v396 = vunpack.c.l.b16 %v341
    %v397 = vunpack.c.l.b16 %v342
    %v398 = vunpack.c.l.b16 %v343
    %v399 = vunpack.c.l.b16 %v344
    %v400 = vunpack.c.l.b16 %v345
    %v401 = vunpack.c.l.b16 %v346
    %v402 = vunpack.c.l.b16 %v347
    %v403 = vunpack.c.l.b16 %v348
    %v404 = vunpack.c.l.b16 %v349
    %v405 = vunpack.c.l.b16 %v350
    %v406 = vunpack.c.l.b16 %v351
    %v407 = vunpack.c.l.b16 %v352
    %v408 = vunpack.c.l.b16 %v353
    %v409 = vunpack.c.l.b16 %v354
    %v410 = vunpack.c.l.b16 %v355
    %v411 = vunpack.c.l.b16 %v356
    %v412 = vpack.c.b16 %v397, %v396
    %v413 = vpack.c.b16 %v399, %v398
    %v414 = vpack.c.b16 %v401, %v400
    %v415 = vpack.c.b16 %v403, %v402
    %v416 = vpack.c.b16 %v405, %v404
    %v417 = vpack.c.b16 %v407, %v406
    %v418 = vpack.c.b16 %v409, %v408
    %v419 = vpack.c.b16 %v411, %v410
    %v444 = vunpack.c.l.b16 %v357
    %v445 = vunpack.c.l.b16 %v358
    %v446 = vunpack.c.l.b16 %v359
    %v447 = vunpack.c.l.b16 %v360
    %v448 = vunpack.c.l.b16 %v361
    %v449 = vunpack.c.l.b16 %v362
    %v450 = vunpack.c.l.b16 %v363
    %v451 = vunpack.c.l.b16 %v364
    %v452 = vunpack.c.l.b16 %v365
    %v453 = vunpack.c.l.b16 %v366
    %v454 = vunpack.c.l.b16 %v367
    %v455 = vunpack.c.l.b16 %v368
    %v456 = vunpack.c.l.b16 %v369
    %v457 = vunpack.c.l.b16 %v370
    %v458 = vunpack.c.l.b16 %v371
    %v459 = vunpack.c.l.b16 %v372
    %v460 = vpack.c.b16 %v445, %v444
    %v461 = vpack.c.b16 %v447, %v446
    %v462 = vpack.c.b16 %v449, %v448
    %v463 = vpack.c.b16 %v451, %v450
    %v464 = vpack.c.b16 %v453, %v452
    %v465 = vpack.c.b16 %v455, %v454
    %v466 = vpack.c.b16 %v457, %v456
    %v467 = vpack.c.b16 %v459, %v458
    %476 = vmatprep.subr.bf16.mxu0 0
    %477 = vmatpush1.bf16.msra.mxu0 %v460
    %478 = vmatprep.subr.bf16.mxu0 0
    %479 = vmatpush1.bf16.msra.mxu0 %v461
    %480 = vmatprep.subr.bf16.mxu0 0
    %481 = vmatpush1.bf16.msra.mxu0 %v462
    %482 = vmatprep.subr.bf16.mxu0 0
    %483 = vmatpush1.bf16.msra.mxu0 %v463
    %484 = vmatprep.subr.bf16.mxu0 0
    %485 = vmatpush1.bf16.msra.mxu0 %v464
    %486 = vmatprep.subr.bf16.mxu0 0
    %487 = vmatpush1.bf16.msra.mxu0 %v465
    %488 = vmatprep.subr.bf16.mxu0 0
    %489 = vmatpush1.bf16.msra.mxu0 %v466
    %490 = vmatprep.subr.bf16.mxu0 0
    %491 = vmatpush1.bf16.msra.mxu0 %v467
    %492 = vmatprep.subr.bf16.mxu0 0
    %493 = vmatpush1.bf16.msra.mxu0 0
    %494 = vmatprep.subr.bf16.mxu0 0
    %495 = vmatpush1.bf16.msra.mxu0 0
    %496 = vmatprep.subr.bf16.mxu0 0
    %497 = vmatpush1.bf16.msra.mxu0 0
    %498 = vmatprep.subr.bf16.mxu0 0
    %499 = vmatpush1.bf16.msra.mxu0 0
    %500 = vmatprep.subr.bf16.mxu0 0
    %501 = vmatpush1.bf16.msra.mxu0 0
    %502 = vmatprep.subr.bf16.mxu0 0
    %503 = vmatpush1.bf16.msra.mxu0 0
    %504 = vmatprep.subr.bf16.mxu0 0
    %505 = vmatpush1.bf16.msra.mxu0 0
    %506 = vmatprep.subr.bf16.mxu0 0
    %507 = vmatpush1.bf16.msra.mxu0 0
    %508 = vmatprep.mubr.bf16.mxu0 0
    %509 = vmatmul.mubr.bf16.gmra.mrb[0].mxu0 %v412
    %v510 = vpop.f32.mrb[0].mxu0
    %v511 = vadd.f32 %v378, %v510
    %v512 = vpop.f32.mrb[0].mxu0
    %v513 = vpop.f32.mrb[0].mxu0
    %v514 = vadd.f32 %v378, %v513
    %v515 = vpop.f32.mrb[0].mxu0
    %516 = vmatprep.mubr.bf16.mxu0 0
    %517 = vmatmul.mubr.bf16.gmra.mrb[0].mxu0 %v413
    %v518 = vpop.f32.mrb[0].mxu0
    %v519 = vadd.f32 %v378, %v518
    %v520 = vpop.f32.mrb[0].mxu0
    %v521 = vpop.f32.mrb[0].mxu0
    %v522 = vadd.f32 %v378, %v521
    %v523 = vpop.f32.mrb[0].mxu0
    %524 = vmatprep.mubr.bf16.mxu0 0
    %525 = vmatmul.mubr.bf16.gmra.mrb[0].mxu0 %v414
    %v526 = vpop.f32.mrb[0].mxu0
    %v527 = vadd.f32 %v378, %v526
    %v528 = vpop.f32.mrb[0].mxu0
    %v529 = vpop.f32.mrb[0].mxu0
    %v530 = vadd.f32 %v378, %v529
    %v531 = vpop.f32.mrb[0].mxu0
    %532 = vmatprep.mubr.bf16.mxu0 0
    %533 = vmatmul.mubr.bf16.gmra.mrb[0].mxu0 %v415
    %v534 = vpop.f32.mrb[0].mxu0
    %v535 = vadd.f32 %v378, %v534
    %v536 = vpop.f32.mrb[0].mxu0
    %v537 = vpop.f32.mrb[0].mxu0
    %v538 = vadd.f32 %v378, %v537
    %v539 = vpop.f32.mrb[0].mxu0
    %540 = vmatprep.mubr.bf16.mxu0 0
    %541 = vmatmul.mubr.bf16.gmra.mrb[0].mxu0 %v416
    %v542 = vpop.f32.mrb[0].mxu0
    %v543 = vadd.f32 %v378, %v542
    %v544 = vpop.f32.mrb[0].mxu0
    %v545 = vpop.f32.mrb[0].mxu0
    %v546 = vadd.f32 %v378, %v545
    %v547 = vpop.f32.mrb[0].mxu0
    %548 = vmatprep.mubr.bf16.mxu0 0
    %549 = vmatmul.mubr.bf16.gmra.mrb[0].mxu0 %v417
    %v550 = vpop.f32.mrb[0].mxu0
    %v551 = vadd.f32 %v378, %v550
    %v552 = vpop.f32.mrb[0].mxu0
    %v553 = vpop.f32.mrb[0].mxu0
    %v554 = vadd.f32 %v378, %v553
    %v555 = vpop.f32.mrb[0].mxu0
    %556 = vmatprep.mubr.bf16.mxu0 0
    %557 = vmatmul.mubr.bf16.gmra.mrb[0].mxu0 %v418
    %v558 = vpop.f32.mrb[0].mxu0
    %v559 = vadd.f32 %v378, %v558
    %v560 = vpop.f32.mrb[0].mxu0
    %v561 = vpop.f32.mrb[0].mxu0
    %v562 = vadd.f32 %v378, %v561
    %v563 = vpop.f32.mrb[0].mxu0
    %564 = vmatprep.mubr.bf16.mxu0 0
    %565 = vmatmul.mubr.bf16.gmra.mrb[0].mxu0 %v419
    %v566 = vpop.f32.mrb[0].mxu0
    %v567 = vadd.f32 %v378, %v566
    %v568 = vpop.f32.mrb[0].mxu0
    %v569 = vpop.f32.mrb[0].mxu0
    %v570 = vadd.f32 %v378, %v569
    %v571 = vpop.f32.mrb[0].mxu0
    %572 = vdwg.mxu0
    %v573 = vmax.f32 %v511, 0.0
    %v574 = vmax.f32 %v514, 0.0
    %v575 = vmax.f32 %v519, 0.0
    %v576 = vmax.f32 %v522, 0.0
    %v577 = vmax.f32 %v527, 0.0
    %v578 = vmax.f32 %v530, 0.0
    %v579 = vmax.f32 %v535, 0.0
    %v580 = vmax.f32 %v538, 0.0
    %v581 = vmax.f32 %v543, 0.0
    %v582 = vmax.f32 %v546, 0.0
    %v583 = vmax.f32 %v551, 0.0
    %v584 = vmax.f32 %v554, 0.0
    %v585 = vmax.f32 %v559, 0.0
    %v586 = vmax.f32 %v562, 0.0
    %v587 = vmax.f32 %v567, 0.0
    %v588 = vmax.f32 %v570, 0.0
    %v589 = vpack.c.bf16 %v574, %v573
    %v590 = vpack.c.bf16 %v576, %v575
    %v591 = vpack.c.bf16 %v578, %v577
    %v592 = vpack.c.bf16 %v580, %v579
    %v593 = vpack.c.bf16 %v582, %v581
    %v594 = vpack.c.bf16 %v584, %v583
    %v595 = vpack.c.bf16 %v586, %v585
    %v596 = vpack.c.bf16 %v588, %v587
    %v597 = vld [vmem:[#allocation26] sm:$0xf]
    %v598 = vld [vmem:[#allocation26 + $0x4] sm:$0xf]
    %v599 = vld [vmem:[#allocation26 + $0x8] sm:$0xf]
    %v600 = vld [vmem:[#allocation26 + $0xc] sm:$0xf]
    %v601 = vld [vmem:[#allocation26 + $0x10] sm:$0xf]
    %v602 = vld [vmem:[#allocation26 + $0x14] sm:$0xf]
    %v603 = vld [vmem:[#allocation26 + $0x18] sm:$0xf]
    %v604 = vld [vmem:[#allocation26 + $0x1c] sm:$0xf]
    %v605 = vld [vmem:[#allocation26 + $0x20] sm:$0xf]
    %v606 = vld [vmem:[#allocation26 + $0x24] sm:$0xf]
    %v607 = vld [vmem:[#allocation26 + $0x28] sm:$0xf]
    %v608 = vld [vmem:[#allocation26 + $0x2c] sm:$0xf]
    %v609 = vld [vmem:[#allocation26 + $0x30] sm:$0xf]
    %v610 = vld [vmem:[#allocation26 + $0x34] sm:$0xf]
    %v611 = vld [vmem:[#allocation26 + $0x38] sm:$0xf]
    %v612 = vld [vmem:[#allocation26 + $0x3c] sm:$0xf]
    %v613 = vld [vmem:[#allocation28] sm:$0x1]
    %v615 = vlaneseq
    %v616 = vshrl.u32 %v615, 7
    %v617 = vsub.s32 0, %v616
    %v618 = vrot.slane %v613, %v617
    %v636 = vunpack.c.l.b16 %v597
    %v637 = vunpack.c.l.b16 %v598
    %v638 = vunpack.c.l.b16 %v599
    %v639 = vunpack.c.l.b16 %v600
    %v640 = vunpack.c.l.b16 %v601
    %v641 = vunpack.c.l.b16 %v602
    %v642 = vunpack.c.l.b16 %v603
    %v643 = vunpack.c.l.b16 %v604
    %v644 = vunpack.c.l.b16 %v605
    %v645 = vunpack.c.l.b16 %v606
    %v646 = vunpack.c.l.b16 %v607
    %v647 = vunpack.c.l.b16 %v608
    %v648 = vunpack.c.l.b16 %v609
    %v649 = vunpack.c.l.b16 %v610
    %v650 = vunpack.c.l.b16 %v611
    %v651 = vunpack.c.l.b16 %v612
    %v652 = vpack.c.b16 %v637, %v636
    %v653 = vpack.c.b16 %v639, %v638
    %v654 = vpack.c.b16 %v641, %v640
    %v655 = vpack.c.b16 %v643, %v642
    %v656 = vpack.c.b16 %v645, %v644
    %v657 = vpack.c.b16 %v647, %v646
    %v658 = vpack.c.b16 %v649, %v648
    %v659 = vpack.c.b16 %v651, %v650
    %668 = vmatprep.subr.bf16.mxu0 0
    %669 = vmatpush1.bf16.msra.mxu0 %v652
    %670 = vmatprep.subr.bf16.mxu0 0
    %671 = vmatpush1.bf16.msra.mxu0 %v653
    %672 = vmatprep.subr.bf16.mxu0 0
    %673 = vmatpush1.bf16.msra.mxu0 %v654
    %674 = vmatprep.subr.bf16.mxu0 0
    %675 = vmatpush1.bf16.msra.mxu0 %v655
    %676 = vmatprep.subr.bf16.mxu0 0
    %677 = vmatpush1.bf16.msra.mxu0 %v656
    %678 = vmatprep.subr.bf16.mxu0 0
    %679 = vmatpush1.bf16.msra.mxu0 %v657
    %680 = vmatprep.subr.bf16.mxu0 0
    %681 = vmatpush1.bf16.msra.mxu0 %v658
    %682 = vmatprep.subr.bf16.mxu0 0
    %683 = vmatpush1.bf16.msra.mxu0 %v659
    %684 = vmatprep.subr.bf16.mxu0 0
    %685 = vmatpush1.bf16.msra.mxu0 0
    %686 = vmatprep.subr.bf16.mxu0 0
    %687 = vmatpush1.bf16.msra.mxu0 0
    %688 = vmatprep.subr.bf16.mxu0 0
    %689 = vmatpush1.bf16.msra.mxu0 0
    %690 = vmatprep.subr.bf16.mxu0 0
    %691 = vmatpush1.bf16.msra.mxu0 0
    %692 = vmatprep.subr.bf16.mxu0 0
    %693 = vmatpush1.bf16.msra.mxu0 0
    %694 = vmatprep.subr.bf16.mxu0 0
    %695 = vmatpush1.bf16.msra.mxu0 0
    %696 = vmatprep.subr.bf16.mxu0 0
    %697 = vmatpush1.bf16.msra.mxu0 0
    %698 = vmatprep.subr.bf16.mxu0 0
    %699 = vmatpush1.bf16.msra.mxu0 0
    %700 = vmatprep.mubr.bf16.mxu0 0
    %701 = vmatmul.mubr.bf16.gmra.mrb[0].mxu0 %v589
    %v702 = vpop.f32.mrb[0].mxu0
    %v703 = vadd.f32 %v618, %v702
    %v704 = vpop.f32.mrb[0].mxu0
    %v705 = vpop.f32.mrb[0].mxu0
    %v706 = vadd.f32 %v618, %v705
    %v707 = vpop.f32.mrb[0].mxu0
    %708 = vmatprep.mubr.bf16.mxu0 0
    %709 = vmatmul.mubr.bf16.gmra.mrb[0].mxu0 %v590
    %v710 = vpop.f32.mrb[0].mxu0
    %v711 = vadd.f32 %v618, %v710
    %v712 = vpop.f32.mrb[0].mxu0
    %v713 = vpop.f32.mrb[0].mxu0
    %v714 = vadd.f32 %v618, %v713
    %v715 = vpop.f32.mrb[0].mxu0
    %716 = vmatprep.mubr.bf16.mxu0 0
    %717 = vmatmul.mubr.bf16.gmra.mrb[0].mxu0 %v591
    %v718 = vpop.f32.mrb[0].mxu0
    %v719 = vadd.f32 %v618, %v718
    %v720 = vpop.f32.mrb[0].mxu0
    %v721 = vpop.f32.mrb[0].mxu0
    %v722 = vadd.f32 %v618, %v721
    %v723 = vpop.f32.mrb[0].mxu0
    %724 = vmatprep.mubr.bf16.mxu0 0
    %725 = vmatmul.mubr.bf16.gmra.mrb[0].mxu0 %v592
    %v726 = vpop.f32.mrb[0].mxu0
    %v727 = vadd.f32 %v618, %v726
    %v728 = vpop.f32.mrb[0].mxu0
    %v729 = vpop.f32.mrb[0].mxu0
    %v730 = vadd.f32 %v618, %v729
    %v731 = vpop.f32.mrb[0].mxu0
    %732 = vmatprep.mubr.bf16.mxu0 0
    %733 = vmatmul.mubr.bf16.gmra.mrb[0].mxu0 %v593
    %v734 = vpop.f32.mrb[0].mxu0
    %v735 = vadd.f32 %v618, %v734
    %v736 = vpop.f32.mrb[0].mxu0
    %v737 = vpop.f32.mrb[0].mxu0
    %v738 = vadd.f32 %v618, %v737
    %v739 = vpop.f32.mrb[0].mxu0
    %740 = vmatprep.mubr.bf16.mxu0 0
    %741 = vmatmul.mubr.bf16.gmra.mrb[0].mxu0 %v594
    %v742 = vpop.f32.mrb[0].mxu0
    %v743 = vadd.f32 %v618, %v742
    %v744 = vpop.f32.mrb[0].mxu0
    %v745 = vpop.f32.mrb[0].mxu0
    %v746 = vadd.f32 %v618, %v745
    %v747 = vpop.f32.mrb[0].mxu0
    %748 = vmatprep.mubr.bf16.mxu0 0
    %749 = vmatmul.mubr.bf16.gmra.mrb[0].mxu0 %v595
    %v750 = vpop.f32.mrb[0].mxu0
    %v751 = vadd.f32 %v618, %v750
    %v752 = vpop.f32.mrb[0].mxu0
    %v753 = vpop.f32.mrb[0].mxu0
    %v754 = vadd.f32 %v618, %v753
    %v755 = vpop.f32.mrb[0].mxu0
    %756 = vmatprep.mubr.bf16.mxu0 0
    %757 = vmatmul.mubr.bf16.gmra.mrb[0].mxu0 %v596
    %v758 = vpop.f32.mrb[0].mxu0
    %v759 = vadd.f32 %v618, %v758
    %v760 = vpop.f32.mrb[0].mxu0
    %v761 = vpop.f32.mrb[0].mxu0
    %v762 = vadd.f32 %v618, %v761
    %v763 = vpop.f32.mrb[0].mxu0
    %764 = vdwg.mxu0
    %v765 = vld [vmem:[#allocation5] sm:$0xf]
    %v766 = vld [vmem:[#allocation5 + $0x4] sm:$0xf]
    %v767 = vld [vmem:[#allocation5 + $0x8] sm:$0xf]
    %v768 = vld [vmem:[#allocation5 + $0xc] sm:$0xf]
    %v769 = vld [vmem:[#allocation5 + $0x10] sm:$0xf]
    %v770 = vld [vmem:[#allocation5 + $0x14] sm:$0xf]
    %v771 = vld [vmem:[#allocation5 + $0x18] sm:$0xf]
    %v772 = vld [vmem:[#allocation5 + $0x1c] sm:$0xf]
    %v773 = vld [vmem:[#allocation5 + $0x20] sm:$0xf]
    %v774 = vld [vmem:[#allocation5 + $0x24] sm:$0xf]
    %v775 = vld [vmem:[#allocation5 + $0x28] sm:$0xf]
    %v776 = vld [vmem:[#allocation5 + $0x2c] sm:$0xf]
    %v777 = vld [vmem:[#allocation5 + $0x30] sm:$0xf]
    %v778 = vld [vmem:[#allocation5 + $0x34] sm:$0xf]
    %v779 = vld [vmem:[#allocation5 + $0x38] sm:$0xf]
    %v780 = vld [vmem:[#allocation5 + $0x3c] sm:$0xf]
    %v781 = vld [vmem:[#allocation17] sm:$0xf]
    %v782 = vld [vmem:[#allocation17 + $0x4] sm:$0xf]
    %v783 = vld [vmem:[#allocation17 + $0x8] sm:$0xf]
    %v784 = vld [vmem:[#allocation17 + $0xc] sm:$0xf]
    %v785 = vld [vmem:[#allocation17 + $0x10] sm:$0xf]
    %v786 = vld [vmem:[#allocation17 + $0x14] sm:$0xf]
    %v787 = vld [vmem:[#allocation17 + $0x18] sm:$0xf]
    %v788 = vld [vmem:[#allocation17 + $0x1c] sm:$0xf]
    %v789 = vld [vmem:[#allocation17 + $0x20] sm:$0xf]
    %v790 = vld [vmem:[#allocation17 + $0x24] sm:$0xf]
    %v791 = vld [vmem:[#allocation17 + $0x28] sm:$0xf]
    %v792 = vld [vmem:[#allocation17 + $0x2c] sm:$0xf]
    %v793 = vld [vmem:[#allocation17 + $0x30] sm:$0xf]
    %v794 = vld [vmem:[#allocation17 + $0x34] sm:$0xf]
    %v795 = vld [vmem:[#allocation17 + $0x38] sm:$0xf]
    %v796 = vld [vmem:[#allocation17 + $0x3c] sm:$0xf]
    %v797 = vld [vmem:[#allocation19] sm:$0x1]
    %v799 = vlaneseq
    %v800 = vshrl.u32 %v799, 7
    %v801 = vsub.s32 0, %v800
    %v802 = vrot.slane %v797, %v801
    %v820 = vunpack.c.l.b16 %v765
    %v821 = vunpack.c.l.b16 %v766
    %v822 = vunpack.c.l.b16 %v767
    %v823 = vunpack.c.l.b16 %v768
    %v824 = vunpack.c.l.b16 %v769
    %v825 = vunpack.c.l.b16 %v770
    %v826 = vunpack.c.l.b16 %v771
    %v827 = vunpack.c.l.b16 %v772
    %v828 = vunpack.c.l.b16 %v773
    %v829 = vunpack.c.l.b16 %v774
    %v830 = vunpack.c.l.b16 %v775
    %v831 = vunpack.c.l.b16 %v776
    %v832 = vunpack.c.l.b16 %v777
    %v833 = vunpack.c.l.b16 %v778
    %v834 = vunpack.c.l.b16 %v779
    %v835 = vunpack.c.l.b16 %v780
    %v836 = vpack.c.b16 %v821, %v820
    %v837 = vpack.c.b16 %v823, %v822
    %v838 = vpack.c.b16 %v825, %v824
    %v839 = vpack.c.b16 %v827, %v826
    %v840 = vpack.c.b16 %v829, %v828
    %v841 = vpack.c.b16 %v831, %v830
    %v842 = vpack.c.b16 %v833, %v832
    %v843 = vpack.c.b16 %v835, %v834
    %v868 = vunpack.c.l.b16 %v781
    %v869 = vunpack.c.l.b16 %v782
    %v870 = vunpack.c.l.b16 %v783
    %v871 = vunpack.c.l.b16 %v784
    %v872 = vunpack.c.l.b16 %v785
    %v873 = vunpack.c.l.b16 %v786
    %v874 = vunpack.c.l.b16 %v787
    %v875 = vunpack.c.l.b16 %v788
    %v876 = vunpack.c.l.b16 %v789
    %v877 = vunpack.c.l.b16 %v790
    %v878 = vunpack.c.l.b16 %v791
    %v879 = vunpack.c.l.b16 %v792
    %v880 = vunpack.c.l.b16 %v793
    %v881 = vunpack.c.l.b16 %v794
    %v882 = vunpack.c.l.b16 %v795
    %v883 = vunpack.c.l.b16 %v796
    %v884 = vpack.c.b16 %v869, %v868
    %v885 = vpack.c.b16 %v871, %v870
    %v886 = vpack.c.b16 %v873, %v872
    %v887 = vpack.c.b16 %v875, %v874
    %v888 = vpack.c.b16 %v877, %v876
    %v889 = vpack.c.b16 %v879, %v878
    %v890 = vpack.c.b16 %v881, %v880
    %v891 = vpack.c.b16 %v883, %v882
    %900 = vmatprep.subr.bf16.mxu0 0
    %901 = vmatpush1.bf16.msra.mxu0 %v884
    %902 = vmatprep.subr.bf16.mxu0 0
    %903 = vmatpush1.bf16.msra.mxu0 %v885
    %904 = vmatprep.subr.bf16.mxu0 0
    %905 = vmatpush1.bf16.msra.mxu0 %v886
    %906 = vmatprep.subr.bf16.mxu0 0
    %907 = vmatpush1.bf16.msra.mxu0 %v887
    %908 = vmatprep.subr.bf16.mxu0 0
    %909 = vmatpush1.bf16.msra.mxu0 %v888
    %910 = vmatprep.subr.bf16.mxu0 0
    %911 = vmatpush1.bf16.msra.mxu0 %v889
    %912 = vmatprep.subr.bf16.mxu0 0
    %913 = vmatpush1.bf16.msra.mxu0 %v890
    %914 = vmatprep.subr.bf16.mxu0 0
    %915 = vmatpush1.bf16.msra.mxu0 %v891
    %916 = vmatprep.subr.bf16.mxu0 0
    %917 = vmatpush1.bf16.msra.mxu0 0
    %918 = vmatprep.subr.bf16.mxu0 0
    %919 = vmatpush1.bf16.msra.mxu0 0
    %920 = vmatprep.subr.bf16.mxu0 0
    %921 = vmatpush1.bf16.msra.mxu0 0
    %922 = vmatprep.subr.bf16.mxu0 0
    %923 = vmatpush1.bf16.msra.mxu0 0
    %924 = vmatprep.subr.bf16.mxu0 0
    %925 = vmatpush1.bf16.msra.mxu0 0
    %926 = vmatprep.subr.bf16.mxu0 0
    %927 = vmatpush1.bf16.msra.mxu0 0
    %928 = vmatprep.subr.bf16.mxu0 0
    %929 = vmatpush1.bf16.msra.mxu0 0
    %930 = vmatprep.subr.bf16.mxu0 0
    %931 = vmatpush1.bf16.msra.mxu0 0
    %932 = vmatprep.mubr.bf16.mxu0 0
    %933 = vmatmul.mubr.bf16.gmra.mrb[0].mxu0 %v836
    %v934 = vpop.f32.mrb[0].mxu0
    %v935 = vadd.f32 %v802, %v934
    %v936 = vpop.f32.mrb[0].mxu0
    %v937 = vpop.f32.mrb[0].mxu0
    %v938 = vadd.f32 %v802, %v937
    %v939 = vpop.f32.mrb[0].mxu0
    %940 = vmatprep.mubr.bf16.mxu0 0
    %941 = vmatmul.mubr.bf16.gmra.mrb[0].mxu0 %v837
    %v942 = vpop.f32.mrb[0].mxu0
    %v943 = vadd.f32 %v802, %v942
    %v944 = vpop.f32.mrb[0].mxu0
    %v945 = vpop.f32.mrb[0].mxu0
    %v946 = vadd.f32 %v802, %v945
    %v947 = vpop.f32.mrb[0].mxu0
    %948 = vmatprep.mubr.bf16.mxu0 0
    %949 = vmatmul.mubr.bf16.gmra.mrb[0].mxu0 %v838
    %v950 = vpop.f32.mrb[0].mxu0
    %v951 = vadd.f32 %v802, %v950
    %v952 = vpop.f32.mrb[0].mxu0
    %v953 = vpop.f32.mrb[0].mxu0
    %v954 = vadd.f32 %v802, %v953
    %v955 = vpop.f32.mrb[0].mxu0
    %956 = vmatprep.mubr.bf16.mxu0 0
    %957 = vmatmul.mubr.bf16.gmra.mrb[0].mxu0 %v839
    %v958 = vpop.f32.mrb[0].mxu0
    %v959 = vadd.f32 %v802, %v958
    %v960 = vpop.f32.mrb[0].mxu0
    %v961 = vpop.f32.mrb[0].mxu0
    %v962 = vadd.f32 %v802, %v961
    %v963 = vpop.f32.mrb[0].mxu0
    %964 = vmatprep.mubr.bf16.mxu0 0
    %965 = vmatmul.mubr.bf16.gmra.mrb[0].mxu0 %v840
    %v966 = vpop.f32.mrb[0].mxu0
    %v967 = vadd.f32 %v802, %v966
    %v968 = vpop.f32.mrb[0].mxu0
    %v969 = vpop.f32.mrb[0].mxu0
    %v970 = vadd.f32 %v802, %v969
    %v971 = vpop.f32.mrb[0].mxu0
    %972 = vmatprep.mubr.bf16.mxu0 0
    %973 = vmatmul.mubr.bf16.gmra.mrb[0].mxu0 %v841
    %v974 = vpop.f32.mrb[0].mxu0
    %v975 = vadd.f32 %v802, %v974
    %v976 = vpop.f32.mrb[0].mxu0
    %v977 = vpop.f32.mrb[0].mxu0
    %v978 = vadd.f32 %v802, %v977
    %v979 = vpop.f32.mrb[0].mxu0
    %980 = vmatprep.mubr.bf16.mxu0 0
    %981 = vmatmul.mubr.bf16.gmra.mrb[0].mxu0 %v842
    %v982 = vpop.f32.mrb[0].mxu0
    %v983 = vadd.f32 %v802, %v982
    %v984 = vpop.f32.mrb[0].mxu0
    %v985 = vpop.f32.mrb[0].mxu0
    %v986 = vadd.f32 %v802, %v985
    %v987 = vpop.f32.mrb[0].mxu0
    %988 = vmatprep.mubr.bf16.mxu0 0
    %989 = vmatmul.mubr.bf16.gmra.mrb[0].mxu0 %v843
    %v990 = vpop.f32.mrb[0].mxu0
    %v991 = vadd.f32 %v802, %v990
    %v992 = vpop.f32.mrb[0].mxu0
    %v993 = vpop.f32.mrb[0].mxu0
    %v994 = vadd.f32 %v802, %v993
    %v995 = vpop.f32.mrb[0].mxu0
    %996 = vdwg.mxu0
    %v997 = vmax.f32 %v935, 0.0
    %v998 = vmax.f32 %v938, 0.0
    %v999 = vmax.f32 %v943, 0.0
    %v1000 = vmax.f32 %v946, 0.0
    %v1001 = vmax.f32 %v951, 0.0
    %v1002 = vmax.f32 %v954, 0.0
    %v1003 = vmax.f32 %v959, 0.0
    %v1004 = vmax.f32 %v962, 0.0
    %v1005 = vmax.f32 %v967, 0.0
    %v1006 = vmax.f32 %v970, 0.0
    %v1007 = vmax.f32 %v975, 0.0
    %v1008 = vmax.f32 %v978, 0.0
    %v1009 = vmax.f32 %v983, 0.0
    %v1010 = vmax.f32 %v986, 0.0
    %v1011 = vmax.f32 %v991, 0.0
    %v1012 = vmax.f32 %v994, 0.0
    %v1013 = vpack.c.bf16 %v998, %v997
    %v1014 = vpack.c.bf16 %v1000, %v999
    %v1015 = vpack.c.bf16 %v1002, %v1001
    %v1016 = vpack.c.bf16 %v1004, %v1003
    %v1017 = vpack.c.bf16 %v1006, %v1005
    %v1018 = vpack.c.bf16 %v1008, %v1007
    %v1019 = vpack.c.bf16 %v1010, %v1009
    %v1020 = vpack.c.bf16 %v1012, %v1011
    %v1021 = vld [vmem:[#allocation20] sm:$0xf]
    %v1022 = vld [vmem:[#allocation20 + $0x4] sm:$0xf]
    %v1023 = vld [vmem:[#allocation20 + $0x8] sm:$0xf]
    %v1024 = vld [vmem:[#allocation20 + $0xc] sm:$0xf]
    %v1025 = vld [vmem:[#allocation20 + $0x10] sm:$0xf]
    %v1026 = vld [vmem:[#allocation20 + $0x14] sm:$0xf]
    %v1027 = vld [vmem:[#allocation20 + $0x18] sm:$0xf]
    %v1028 = vld [vmem:[#allocation20 + $0x1c] sm:$0xf]
    %v1029 = vld [vmem:[#allocation20 + $0x20] sm:$0xf]
    %v1030 = vld [vmem:[#allocation20 + $0x24] sm:$0xf]
    %v1031 = vld [vmem:[#allocation20 + $0x28] sm:$0xf]
    %v1032 = vld [vmem:[#allocation20 + $0x2c] sm:$0xf]
    %v1033 = vld [vmem:[#allocation20 + $0x30] sm:$0xf]
    %v1034 = vld [vmem:[#allocation20 + $0x34] sm:$0xf]
    %v1035 = vld [vmem:[#allocation20 + $0x38] sm:$0xf]
    %v1036 = vld [vmem:[#allocation20 + $0x3c] sm:$0xf]
    %v1037 = vld [vmem:[#allocation22] sm:$0x1]
    %v1039 = vlaneseq
    %v1040 = vshrl.u32 %v1039, 7
    %v1041 = vsub.s32 0, %v1040
    %v1042 = vrot.slane %v1037, %v1041
    %v1060 = vunpack.c.l.b16 %v1021
    %v1061 = vunpack.c.l.b16 %v1022
    %v1062 = vunpack.c.l.b16 %v1023
    %v1063 = vunpack.c.l.b16 %v1024
    %v1064 = vunpack.c.l.b16 %v1025
    %v1065 = vunpack.c.l.b16 %v1026
    %v1066 = vunpack.c.l.b16 %v1027
    %v1067 = vunpack.c.l.b16 %v1028
    %v1068 = vunpack.c.l.b16 %v1029
    %v1069 = vunpack.c.l.b16 %v1030
    %v1070 = vunpack.c.l.b16 %v1031
    %v1071 = vunpack.c.l.b16 %v1032
    %v1072 = vunpack.c.l.b16 %v1033
    %v1073 = vunpack.c.l.b16 %v1034
    %v1074 = vunpack.c.l.b16 %v1035
    %v1075 = vunpack.c.l.b16 %v1036
    %v1076 = vpack.c.b16 %v1061, %v1060
    %v1077 = vpack.c.b16 %v1063, %v1062
    %v1078 = vpack.c.b16 %v1065, %v1064
    %v1079 = vpack.c.b16 %v1067, %v1066
    %v1080 = vpack.c.b16 %v1069, %v1068
    %v1081 = vpack.c.b16 %v1071, %v1070
    %v1082 = vpack.c.b16 %v1073, %v1072
    %v1083 = vpack.c.b16 %v1075, %v1074
    %1092 = vmatprep.subr.bf16.mxu0 0
    %1093 = vmatpush1.bf16.msra.mxu0 %v1076
    %1094 = vmatprep.subr.bf16.mxu0 0
    %1095 = vmatpush1.bf16.msra.mxu0 %v1077
    %1096 = vmatprep.subr.bf16.mxu0 0
    %1097 = vmatpush1.bf16.msra.mxu0 %v1078
    %1098 = vmatprep.subr.bf16.mxu0 0
    %1099 = vmatpush1.bf16.msra.mxu0 %v1079
    %1100 = vmatprep.subr.bf16.mxu0 0
    %1101 = vmatpush1.bf16.msra.mxu0 %v1080
    %1102 = vmatprep.subr.bf16.mxu0 0
    %1103 = vmatpush1.bf16.msra.mxu0 %v1081
    %1104 = vmatprep.subr.bf16.mxu0 0
    %1105 = vmatpush1.bf16.msra.mxu0 %v1082
    %1106 = vmatprep.subr.bf16.mxu0 0
    %1107 = vmatpush1.bf16.msra.mxu0 %v1083
    %1108 = vmatprep.subr.bf16.mxu0 0
    %1109 = vmatpush1.bf16.msra.mxu0 0
    %1110 = vmatprep.subr.bf16.mxu0 0
    %1111 = vmatpush1.bf16.msra.mxu0 0
    %1112 = vmatprep.subr.bf16.mxu0 0
    %1113 = vmatpush1.bf16.msra.mxu0 0
    %1114 = vmatprep.subr.bf16.mxu0 0
    %1115 = vmatpush1.bf16.msra.mxu0 0
    %1116 = vmatprep.subr.bf16.mxu0 0
    %1117 = vmatpush1.bf16.msra.mxu0 0
    %1118 = vmatprep.subr.bf16.mxu0 0
    %1119 = vmatpush1.bf16.msra.mxu0 0
    %1120 = vmatprep.subr.bf16.mxu0 0
    %1121 = vmatpush1.bf16.msra.mxu0 0
    %1122 = vmatprep.subr.bf16.mxu0 0
    %1123 = vmatpush1.bf16.msra.mxu0 0
    %1124 = vmatprep.mubr.bf16.mxu0 0
    %1125 = vmatmul.mubr.bf16.gmra.mrb[0].mxu0 %v1013
    %v1126 = vpop.f32.mrb[0].mxu0
    %v1127 = vadd.f32 %v1042, %v1126
    %v1128 = vpop.f32.mrb[0].mxu0
    %v1129 = vpop.f32.mrb[0].mxu0
    %v1130 = vadd.f32 %v1042, %v1129
    %v1131 = vpop.f32.mrb[0].mxu0
    %1132 = vmatprep.mubr.bf16.mxu0 0
    %1133 = vmatmul.mubr.bf16.gmra.mrb[0].mxu0 %v1014
    %v1134 = vpop.f32.mrb[0].mxu0
    %v1135 = vadd.f32 %v1042, %v1134
    %v1136 = vpop.f32.mrb[0].mxu0
    %v1137 = vpop.f32.mrb[0].mxu0
    %v1138 = vadd.f32 %v1042, %v1137
    %v1139 = vpop.f32.mrb[0].mxu0
    %1140 = vmatprep.mubr.bf16.mxu0 0
    %1141 = vmatmul.mubr.bf16.gmra.mrb[0].mxu0 %v1015
    %v1142 = vpop.f32.mrb[0].mxu0
    %v1143 = vadd.f32 %v1042, %v1142
    %v1144 = vpop.f32.mrb[0].mxu0
    %v1145 = vpop.f32.mrb[0].mxu0
    %v1146 = vadd.f32 %v1042, %v1145
    %v1147 = vpop.f32.mrb[0].mxu0
    %1148 = vmatprep.mubr.bf16.mxu0 0
    %1149 = vmatmul.mubr.bf16.gmra.mrb[0].mxu0 %v1016
    %v1150 = vpop.f32.mrb[0].mxu0
    %v1151 = vadd.f32 %v1042, %v1150
    %v1152 = vpop.f32.mrb[0].mxu0
    %v1153 = vpop.f32.mrb[0].mxu0
    %v1154 = vadd.f32 %v1042, %v1153
    %v1155 = vpop.f32.mrb[0].mxu0
    %1156 = vmatprep.mubr.bf16.mxu0 0
    %1157 = vmatmul.mubr.bf16.gmra.mrb[0].mxu0 %v1017
    %v1158 = vpop.f32.mrb[0].mxu0
    %v1159 = vadd.f32 %v1042, %v1158
    %v1160 = vpop.f32.mrb[0].mxu0
    %v1161 = vpop.f32.mrb[0].mxu0
    %v1162 = vadd.f32 %v1042, %v1161
    %v1163 = vpop.f32.mrb[0].mxu0
    %1164 = vmatprep.mubr.bf16.mxu0 0
    %1165 = vmatmul.mubr.bf16.gmra.mrb[0].mxu0 %v1018
    %v1166 = vpop.f32.mrb[0].mxu0
    %v1167 = vadd.f32 %v1042, %v1166
    %v1168 = vpop.f32.mrb[0].mxu0
    %v1169 = vpop.f32.mrb[0].mxu0
    %v1170 = vadd.f32 %v1042, %v1169
    %v1171 = vpop.f32.mrb[0].mxu0
    %1172 = vmatprep.mubr.bf16.mxu0 0
    %1173 = vmatmul.mubr.bf16.gmra.mrb[0].mxu0 %v1019
    %v1174 = vpop.f32.mrb[0].mxu0
    %v1175 = vadd.f32 %v1042, %v1174
    %v1176 = vpop.f32.mrb[0].mxu0
    %v1177 = vpop.f32.mrb[0].mxu0
    %v1178 = vadd.f32 %v1042, %v1177
    %v1179 = vpop.f32.mrb[0].mxu0
    %1180 = vmatprep.mubr.bf16.mxu0 0
    %1181 = vmatmul.mubr.bf16.gmra.mrb[0].mxu0 %v1020
    %v1182 = vpop.f32.mrb[0].mxu0
    %v1183 = vadd.f32 %v1042, %v1182
    %v1184 = vpop.f32.mrb[0].mxu0
    %v1185 = vpop.f32.mrb[0].mxu0
    %v1186 = vadd.f32 %v1042, %v1185
    %v1187 = vpop.f32.mrb[0].mxu0
    %1188 = vdwg.mxu0
    %v1189 = vpack.c.bf16 %v706, %v703
    %v1190 = vpack.c.bf16 %v714, %v711
    %v1191 = vpack.c.bf16 %v722, %v719
    %v1192 = vpack.c.bf16 %v730, %v727
    %v1193 = vpack.c.bf16 %v738, %v735
    %v1194 = vpack.c.bf16 %v746, %v743
    %v1195 = vpack.c.bf16 %v754, %v751
    %v1196 = vpack.c.bf16 %v762, %v759
    %v1197 = vld [vmem:[#allocation31] sm:$0xf]
    %v1198 = vld [vmem:[#allocation31 + $0x4] sm:$0xf]
    %v1199 = vld [vmem:[#allocation31 + $0x8] sm:$0xf]
    %v1200 = vld [vmem:[#allocation31 + $0xc] sm:$0xf]
    %v1201 = vld [vmem:[#allocation31 + $0x10] sm:$0xf]
    %v1202 = vld [vmem:[#allocation31 + $0x14] sm:$0xf]
    %v1203 = vld [vmem:[#allocation31 + $0x18] sm:$0xf]
    %v1204 = vld [vmem:[#allocation31 + $0x1c] sm:$0xf]
    %v1205 = vld [vmem:[#allocation31 + $0x20] sm:$0xf]
    %v1206 = vld [vmem:[#allocation31 + $0x24] sm:$0xf]
    %v1207 = vld [vmem:[#allocation31 + $0x28] sm:$0xf]
    %v1208 = vld [vmem:[#allocation31 + $0x2c] sm:$0xf]
    %v1209 = vld [vmem:[#allocation31 + $0x30] sm:$0xf]
    %v1210 = vld [vmem:[#allocation31 + $0x34] sm:$0xf]
    %v1211 = vld [vmem:[#allocation31 + $0x38] sm:$0xf]
    %v1212 = vld [vmem:[#allocation31 + $0x3c] sm:$0xf]
    %v1213 = vld [vmem:[%s22] sm:$0x1]
    %v1215 = vlaneseq
    %v1216 = vshrl.u32 %v1215, 7
    %v1217 = vsub.s32 0, %v1216
    %v1218 = vrot.slane %v1213, %v1217
    %v1236 = vunpack.c.l.b16 %v1197
    %v1237 = vunpack.c.l.b16 %v1198
    %v1238 = vunpack.c.l.b16 %v1199
    %v1239 = vunpack.c.l.b16 %v1200
    %v1240 = vunpack.c.l.b16 %v1201
    %v1241 = vunpack.c.l.b16 %v1202
    %v1242 = vunpack.c.l.b16 %v1203
    %v1243 = vunpack.c.l.b16 %v1204
    %v1244 = vunpack.c.l.b16 %v1205
    %v1245 = vunpack.c.l.b16 %v1206
    %v1246 = vunpack.c.l.b16 %v1207
    %v1247 = vunpack.c.l.b16 %v1208
    %v1248 = vunpack.c.l.b16 %v1209
    %v1249 = vunpack.c.l.b16 %v1210
    %v1250 = vunpack.c.l.b16 %v1211
    %v1251 = vunpack.c.l.b16 %v1212
    %v1252 = vpack.c.b16 %v1237, %v1236
    %v1253 = vpack.c.b16 %v1239, %v1238
    %v1254 = vpack.c.b16 %v1241, %v1240
    %v1255 = vpack.c.b16 %v1243, %v1242
    %v1256 = vpack.c.b16 %v1245, %v1244
    %v1257 = vpack.c.b16 %v1247, %v1246
    %v1258 = vpack.c.b16 %v1249, %v1248
    %v1259 = vpack.c.b16 %v1251, %v1250
    %1268 = vmatprep.subr.bf16.mxu0 0
    %1269 = vmatpush1.bf16.msra.mxu0 %v1252
    %1270 = vmatprep.subr.bf16.mxu0 0
    %1271 = vmatpush1.bf16.msra.mxu0 %v1253
    %1272 = vmatprep.subr.bf16.mxu0 0
    %1273 = vmatpush1.bf16.msra.mxu0 %v1254
    %1274 = vmatprep.subr.bf16.mxu0 0
    %1275 = vmatpush1.bf16.msra.mxu0 %v1255
    %1276 = vmatprep.subr.bf16.mxu0 0
    %1277 = vmatpush1.bf16.msra.mxu0 %v1256
    %1278 = vmatprep.subr.bf16.mxu0 0
    %1279 = vmatpush1.bf16.msra.mxu0 %v1257
    %1280 = vmatprep.subr.bf16.mxu0 0
    %1281 = vmatpush1.bf16.msra.mxu0 %v1258
    %1282 = vmatprep.subr.bf16.mxu0 0
    %1283 = vmatpush1.bf16.msra.mxu0 %v1259
    %1284 = vmatprep.subr.bf16.mxu0 0
    %1285 = vmatpush1.bf16.msra.mxu0 0
    %1286 = vmatprep.subr.bf16.mxu0 0
    %1287 = vmatpush1.bf16.msra.mxu0 0
    %1288 = vmatprep.subr.bf16.mxu0 0
    %1289 = vmatpush1.bf16.msra.mxu0 0
    %1290 = vmatprep.subr.bf16.mxu0 0
    %1291 = vmatpush1.bf16.msra.mxu0 0
    %1292 = vmatprep.subr.bf16.mxu0 0
    %1293 = vmatpush1.bf16.msra.mxu0 0
    %1294 = vmatprep.subr.bf16.mxu0 0
    %1295 = vmatpush1.bf16.msra.mxu0 0
    %1296 = vmatprep.subr.bf16.mxu0 0
    %1297 = vmatpush1.bf16.msra.mxu0 0
    %1298 = vmatprep.subr.bf16.mxu0 0
    %1299 = vmatpush1.bf16.msra.mxu0 0
    %1300 = vmatprep.mubr.bf16.mxu0 0
    %1301 = vmatmul.mubr.bf16.gmra.mrb[0].mxu0 %v1189
    %v1302 = vpop.f32.mrb[0].mxu0
    %v1303 = vadd.f32 %v1218, %v1302
    %v1304 = vpop.f32.mrb[0].mxu0
    %v1305 = vpop.f32.mrb[0].mxu0
    %v1306 = vadd.f32 %v1218, %v1305
    %v1307 = vpop.f32.mrb[0].mxu0
    %1308 = vmatprep.mubr.bf16.mxu0 0
    %1309 = vmatmul.mubr.bf16.gmra.mrb[0].mxu0 %v1190
    %v1310 = vpop.f32.mrb[0].mxu0
    %v1311 = vadd.f32 %v1218, %v1310
    %v1312 = vpop.f32.mrb[0].mxu0
    %v1313 = vpop.f32.mrb[0].mxu0
    %v1314 = vadd.f32 %v1218, %v1313
    %v1315 = vpop.f32.mrb[0].mxu0
    %1316 = vmatprep.mubr.bf16.mxu0 0
    %1317 = vmatmul.mubr.bf16.gmra.mrb[0].mxu0 %v1191
    %v1318 = vpop.f32.mrb[0].mxu0
    %v1319 = vadd.f32 %v1218, %v1318
    %v1320 = vpop.f32.mrb[0].mxu0
    %v1321 = vpop.f32.mrb[0].mxu0
    %v1322 = vadd.f32 %v1218, %v1321
    %v1323 = vpop.f32.mrb[0].mxu0
    %1324 = vmatprep.mubr.bf16.mxu0 0
    %1325 = vmatmul.mubr.bf16.gmra.mrb[0].mxu0 %v1192
    %v1326 = vpop.f32.mrb[0].mxu0
    %v1327 = vadd.f32 %v1218, %v1326
    %v1328 = vpop.f32.mrb[0].mxu0
    %v1329 = vpop.f32.mrb[0].mxu0
    %v1330 = vadd.f32 %v1218, %v1329
    %v1331 = vpop.f32.mrb[0].mxu0
    %1332 = vmatprep.mubr.bf16.mxu0 0
    %1333 = vmatmul.mubr.bf16.gmra.mrb[0].mxu0 %v1193
    %v1334 = vpop.f32.mrb[0].mxu0
    %v1335 = vadd.f32 %v1218, %v1334
    %v1336 = vpop.f32.mrb[0].mxu0
    %v1337 = vpop.f32.mrb[0].mxu0
    %v1338 = vadd.f32 %v1218, %v1337
    %v1339 = vpop.f32.mrb[0].mxu0
    %1340 = vmatprep.mubr.bf16.mxu0 0
    %1341 = vmatmul.mubr.bf16.gmra.mrb[0].mxu0 %v1194
    %v1342 = vpop.f32.mrb[0].mxu0
    %v1343 = vadd.f32 %v1218, %v1342
    %v1344 = vpop.f32.mrb[0].mxu0
    %v1345 = vpop.f32.mrb[0].mxu0
    %v1346 = vadd.f32 %v1218, %v1345
    %v1347 = vpop.f32.mrb[0].mxu0
    %1348 = vmatprep.mubr.bf16.mxu0 0
    %1349 = vmatmul.mubr.bf16.gmra.mrb[0].mxu0 %v1195
    %v1350 = vpop.f32.mrb[0].mxu0
    %v1351 = vadd.f32 %v1218, %v1350
    %v1352 = vpop.f32.mrb[0].mxu0
    %v1353 = vpop.f32.mrb[0].mxu0
    %v1354 = vadd.f32 %v1218, %v1353
    %v1355 = vpop.f32.mrb[0].mxu0
    %1356 = vmatprep.mubr.bf16.mxu0 0
    %1357 = vmatmul.mubr.bf16.gmra.mrb[0].mxu0 %v1196
    %v1358 = vpop.f32.mrb[0].mxu0
    %v1359 = vadd.f32 %v1218, %v1358
    %v1360 = vpop.f32.mrb[0].mxu0
    %v1361 = vpop.f32.mrb[0].mxu0
    %v1362 = vadd.f32 %v1218, %v1361
    %v1363 = vpop.f32.mrb[0].mxu0
    %1364 = vdwg.mxu0
    %v1365 = vmax.f32 %v1303, 0.0
    %v1366 = vmax.f32 %v1306, 0.0
    %v1367 = vmax.f32 %v1311, 0.0
    %v1368 = vmax.f32 %v1314, 0.0
    %v1369 = vmax.f32 %v1319, 0.0
    %v1370 = vmax.f32 %v1322, 0.0
    %v1371 = vmax.f32 %v1327, 0.0
    %v1372 = vmax.f32 %v1330, 0.0
    %v1373 = vmax.f32 %v1335, 0.0
    %v1374 = vmax.f32 %v1338, 0.0
    %v1375 = vmax.f32 %v1343, 0.0
    %v1376 = vmax.f32 %v1346, 0.0
    %v1377 = vmax.f32 %v1351, 0.0
    %v1378 = vmax.f32 %v1354, 0.0
    %v1379 = vmax.f32 %v1359, 0.0
    %v1380 = vmax.f32 %v1362, 0.0
    %v1381 = vpack.c.bf16 %v1366, %v1365
    %v1382 = vpack.c.bf16 %v1368, %v1367
    %v1383 = vpack.c.bf16 %v1370, %v1369
    %v1384 = vpack.c.bf16 %v1372, %v1371
    %v1385 = vpack.c.bf16 %v1374, %v1373
    %v1386 = vpack.c.bf16 %v1376, %v1375
    %v1387 = vpack.c.bf16 %v1378, %v1377
    %v1388 = vpack.c.bf16 %v1380, %v1379
    %v1389 = vld [vmem:[#allocation32] sm:$0xf]
    %v1390 = vld [vmem:[#allocation32 + $0x4] sm:$0xf]
    %v1391 = vld [vmem:[#allocation32 + $0x8] sm:$0xf]
    %v1392 = vld [vmem:[#allocation32 + $0xc] sm:$0xf]
    %v1393 = vld [vmem:[#allocation32 + $0x10] sm:$0xf]
    %v1394 = vld [vmem:[#allocation32 + $0x14] sm:$0xf]
    %v1395 = vld [vmem:[#allocation32 + $0x18] sm:$0xf]
    %v1396 = vld [vmem:[#allocation32 + $0x1c] sm:$0xf]
    %v1397 = vld [vmem:[#allocation32 + $0x20] sm:$0xf]
    %v1398 = vld [vmem:[#allocation32 + $0x24] sm:$0xf]
    %v1399 = vld [vmem:[#allocation32 + $0x28] sm:$0xf]
    %v1400 = vld [vmem:[#allocation32 + $0x2c] sm:$0xf]
    %v1401 = vld [vmem:[#allocation32 + $0x30] sm:$0xf]
    %v1402 = vld [vmem:[#allocation32 + $0x34] sm:$0xf]
    %v1403 = vld [vmem:[#allocation32 + $0x38] sm:$0xf]
    %v1404 = vld [vmem:[#allocation32 + $0x3c] sm:$0xf]
    %v1405 = vld [vmem:[%s24] sm:$0x1]
    %v1407 = vlaneseq
    %v1408 = vshrl.u32 %v1407, 7
    %v1409 = vsub.s32 0, %v1408
    %v1410 = vrot.slane %v1405, %v1409
    %v1428 = vunpack.c.l.b16 %v1389
    %v1429 = vunpack.c.l.b16 %v1390
    %v1430 = vunpack.c.l.b16 %v1391
    %v1431 = vunpack.c.l.b16 %v1392
    %v1432 = vunpack.c.l.b16 %v1393
    %v1433 = vunpack.c.l.b16 %v1394
    %v1434 = vunpack.c.l.b16 %v1395
    %v1435 = vunpack.c.l.b16 %v1396
    %v1436 = vunpack.c.l.b16 %v1397
    %v1437 = vunpack.c.l.b16 %v1398
    %v1438 = vunpack.c.l.b16 %v1399
    %v1439 = vunpack.c.l.b16 %v1400
    %v1440 = vunpack.c.l.b16 %v1401
    %v1441 = vunpack.c.l.b16 %v1402
    %v1442 = vunpack.c.l.b16 %v1403
    %v1443 = vunpack.c.l.b16 %v1404
    %v1444 = vpack.c.b16 %v1429, %v1428
    %v1445 = vpack.c.b16 %v1431, %v1430
    %v1446 = vpack.c.b16 %v1433, %v1432
    %v1447 = vpack.c.b16 %v1435, %v1434
    %v1448 = vpack.c.b16 %v1437, %v1436
    %v1449 = vpack.c.b16 %v1439, %v1438
    %v1450 = vpack.c.b16 %v1441, %v1440
    %v1451 = vpack.c.b16 %v1443, %v1442
    %1460 = vmatprep.subr.bf16.mxu0 0
    %1461 = vmatpush1.bf16.msra.mxu0 %v1444
    %1462 = vmatprep.subr.bf16.mxu0 0
    %1463 = vmatpush1.bf16.msra.mxu0 %v1445
    %1464 = vmatprep.subr.bf16.mxu0 0
    %1465 = vmatpush1.bf16.msra.mxu0 %v1446
    %1466 = vmatprep.subr.bf16.mxu0 0
    %1467 = vmatpush1.bf16.msra.mxu0 %v1447
    %1468 = vmatprep.subr.bf16.mxu0 0
    %1469 = vmatpush1.bf16.msra.mxu0 %v1448
    %1470 = vmatprep.subr.bf16.mxu0 0
    %1471 = vmatpush1.bf16.msra.mxu0 %v1449
    %1472 = vmatprep.subr.bf16.mxu0 0
    %1473 = vmatpush1.bf16.msra.mxu0 %v1450
    %1474 = vmatprep.subr.bf16.mxu0 0
    %1475 = vmatpush1.bf16.msra.mxu0 %v1451
    %1476 = vmatprep.subr.bf16.mxu0 0
    %1477 = vmatpush1.bf16.msra.mxu0 0
    %1478 = vmatprep.subr.bf16.mxu0 0
    %1479 = vmatpush1.bf16.msra.mxu0 0
    %1480 = vmatprep.subr.bf16.mxu0 0
    %1481 = vmatpush1.bf16.msra.mxu0 0
    %1482 = vmatprep.subr.bf16.mxu0 0
    %1483 = vmatpush1.bf16.msra.mxu0 0
    %1484 = vmatprep.subr.bf16.mxu0 0
    %1485 = vmatpush1.bf16.msra.mxu0 0
    %1486 = vmatprep.subr.bf16.mxu0 0
    %1487 = vmatpush1.bf16.msra.mxu0 0
    %1488 = vmatprep.subr.bf16.mxu0 0
    %1489 = vmatpush1.bf16.msra.mxu0 0
    %1490 = vmatprep.subr.bf16.mxu0 0
    %1491 = vmatpush1.bf16.msra.mxu0 0
    %1492 = vmatprep.mubr.bf16.mxu0 0
    %1493 = vmatmul.mubr.bf16.gmra.mrb[0].mxu0 %v1381
    %v1494 = vpop.f32.mrb[0].mxu0
    %v1495 = vadd.f32 %v1410, %v1494
    %v1496 = vpop.f32.mrb[0].mxu0
    %v1497 = vpop.f32.mrb[0].mxu0
    %v1498 = vadd.f32 %v1410, %v1497
    %v1499 = vpop.f32.mrb[0].mxu0
    %1500 = vmatprep.mubr.bf16.mxu0 0
    %1501 = vmatmul.mubr.bf16.gmra.mrb[0].mxu0 %v1382
    %v1502 = vpop.f32.mrb[0].mxu0
    %v1503 = vadd.f32 %v1410, %v1502
    %v1504 = vpop.f32.mrb[0].mxu0
    %v1505 = vpop.f32.mrb[0].mxu0
    %v1506 = vadd.f32 %v1410, %v1505
    %v1507 = vpop.f32.mrb[0].mxu0
    %1508 = vmatprep.mubr.bf16.mxu0 0
    %1509 = vmatmul.mubr.bf16.gmra.mrb[0].mxu0 %v1383
    %v1510 = vpop.f32.mrb[0].mxu0
    %v1511 = vadd.f32 %v1410, %v1510
    %v1512 = vpop.f32.mrb[0].mxu0
    %v1513 = vpop.f32.mrb[0].mxu0
    %v1514 = vadd.f32 %v1410, %v1513
    %v1515 = vpop.f32.mrb[0].mxu0
    %1516 = vmatprep.mubr.bf16.mxu0 0
    %1517 = vmatmul.mubr.bf16.gmra.mrb[0].mxu0 %v1384
    %v1518 = vpop.f32.mrb[0].mxu0
    %v1519 = vadd.f32 %v1410, %v1518
    %v1520 = vpop.f32.mrb[0].mxu0
    %v1521 = vpop.f32.mrb[0].mxu0
    %v1522 = vadd.f32 %v1410, %v1521
    %v1523 = vpop.f32.mrb[0].mxu0
    %1524 = vmatprep.mubr.bf16.mxu0 0
    %1525 = vmatmul.mubr.bf16.gmra.mrb[0].mxu0 %v1385
    %v1526 = vpop.f32.mrb[0].mxu0
    %v1527 = vadd.f32 %v1410, %v1526
    %v1528 = vpop.f32.mrb[0].mxu0
    %v1529 = vpop.f32.mrb[0].mxu0
    %v1530 = vadd.f32 %v1410, %v1529
    %v1531 = vpop.f32.mrb[0].mxu0
    %1532 = vmatprep.mubr.bf16.mxu0 0
    %1533 = vmatmul.mubr.bf16.gmra.mrb[0].mxu0 %v1386
    %v1534 = vpop.f32.mrb[0].mxu0
    %v1535 = vadd.f32 %v1410, %v1534
    %v1536 = vpop.f32.mrb[0].mxu0
    %v1537 = vpop.f32.mrb[0].mxu0
    %v1538 = vadd.f32 %v1410, %v1537
    %v1539 = vpop.f32.mrb[0].mxu0
    %1540 = vmatprep.mubr.bf16.mxu0 0
    %1541 = vmatmul.mubr.bf16.gmra.mrb[0].mxu0 %v1387
    %v1542 = vpop.f32.mrb[0].mxu0
    %v1543 = vadd.f32 %v1410, %v1542
    %v1544 = vpop.f32.mrb[0].mxu0
    %v1545 = vpop.f32.mrb[0].mxu0
    %v1546 = vadd.f32 %v1410, %v1545
    %v1547 = vpop.f32.mrb[0].mxu0
    %1548 = vmatprep.mubr.bf16.mxu0 0
    %1549 = vmatmul.mubr.bf16.gmra.mrb[0].mxu0 %v1388
    %v1550 = vpop.f32.mrb[0].mxu0
    %v1551 = vadd.f32 %v1410, %v1550
    %v1552 = vpop.f32.mrb[0].mxu0
    %v1553 = vpop.f32.mrb[0].mxu0
    %v1554 = vadd.f32 %v1410, %v1553
    %v1555 = vpop.f32.mrb[0].mxu0
    %1556 = vdwg.mxu0
    %v1557 = vld [vmem:[#allocation10] sm:$0xf]
    %v1558 = vld [vmem:[#allocation10 + $0x4] sm:$0xf]
    %v1559 = vld [vmem:[#allocation10 + $0x8] sm:$0xf]
    %v1560 = vld [vmem:[#allocation10 + $0xc] sm:$0xf]
    %v1561 = vld [vmem:[#allocation10 + $0x10] sm:$0xf]
    %v1562 = vld [vmem:[#allocation10 + $0x14] sm:$0xf]
    %v1563 = vld [vmem:[#allocation10 + $0x18] sm:$0xf]
    %v1564 = vld [vmem:[#allocation10 + $0x1c] sm:$0xf]
    %v1565 = vld [vmem:[#allocation10 + $0x20] sm:$0xf]
    %v1566 = vld [vmem:[#allocation10 + $0x24] sm:$0xf]
    %v1567 = vld [vmem:[#allocation10 + $0x28] sm:$0xf]
    %v1568 = vld [vmem:[#allocation10 + $0x2c] sm:$0xf]
    %v1569 = vld [vmem:[#allocation10 + $0x30] sm:$0xf]
    %v1570 = vld [vmem:[#allocation10 + $0x34] sm:$0xf]
    %v1571 = vld [vmem:[#allocation10 + $0x38] sm:$0xf]
    %v1572 = vld [vmem:[#allocation10 + $0x3c] sm:$0xf]
    %v1573 = vpack.c.bf16 %v1498, %v1495
    %v1574 = vpack.c.bf16 %v1506, %v1503
    %v1575 = vpack.c.bf16 %v1514, %v1511
    %v1576 = vpack.c.bf16 %v1522, %v1519
    %v1577 = vpack.c.bf16 %v1530, %v1527
    %v1578 = vpack.c.bf16 %v1538, %v1535
    %v1579 = vpack.c.bf16 %v1546, %v1543
    %v1580 = vpack.c.bf16 %v1554, %v1551
    %v1597 = vunpack.c.l.b16 %v1557
    %v1598 = vunpack.c.l.b16 %v1558
    %v1599 = vunpack.c.l.b16 %v1559
    %v1600 = vunpack.c.l.b16 %v1560
    %v1601 = vunpack.c.l.b16 %v1561
    %v1602 = vunpack.c.l.b16 %v1562
    %v1603 = vunpack.c.l.b16 %v1563
    %v1604 = vunpack.c.l.b16 %v1564
    %v1605 = vunpack.c.l.b16 %v1565
    %v1606 = vunpack.c.l.b16 %v1566
    %v1607 = vunpack.c.l.b16 %v1567
    %v1608 = vunpack.c.l.b16 %v1568
    %v1609 = vunpack.c.l.b16 %v1569
    %v1610 = vunpack.c.l.b16 %v1570
    %v1611 = vunpack.c.l.b16 %v1571
    %v1612 = vunpack.c.l.b16 %v1572
    %v1613 = vpack.c.b16 %v1598, %v1597
    %v1614 = vpack.c.b16 %v1600, %v1599
    %v1615 = vpack.c.b16 %v1602, %v1601
    %v1616 = vpack.c.b16 %v1604, %v1603
    %v1617 = vpack.c.b16 %v1606, %v1605
    %v1618 = vpack.c.b16 %v1608, %v1607
    %v1619 = vpack.c.b16 %v1610, %v1609
    %v1620 = vpack.c.b16 %v1612, %v1611
    %1629 = vmatprep.subr.bf16.mxu0 0
    %1630 = vmatpush1.bf16.msra.mxu0 %v1573
    %1631 = vmatprep.subr.bf16.mxu0 0
    %1632 = vmatpush1.bf16.msra.mxu0 %v1574
    %1633 = vmatprep.subr.bf16.mxu0 0
    %1634 = vmatpush1.bf16.msra.mxu0 %v1575
    %1635 = vmatprep.subr.bf16.mxu0 0
    %1636 = vmatpush1.bf16.msra.mxu0 %v1576
    %1637 = vmatprep.subr.bf16.mxu0 0
    %1638 = vmatpush1.bf16.msra.mxu0 %v1577
    %1639 = vmatprep.subr.bf16.mxu0 0
    %1640 = vmatpush1.bf16.msra.mxu0 %v1578
    %1641 = vmatprep.subr.bf16.mxu0 0
    %1642 = vmatpush1.bf16.msra.mxu0 %v1579
    %1643 = vmatprep.subr.bf16.mxu0 0
    %1644 = vmatpush1.bf16.msra.mxu0 %v1580
    %1645 = vmatprep.subr.bf16.mxu0 0
    %1646 = vmatpush1.bf16.msra.mxu0 0
    %1647 = vmatprep.subr.bf16.mxu0 0
    %1648 = vmatpush1.bf16.msra.mxu0 0
    %1649 = vmatprep.subr.bf16.mxu0 0
    %1650 = vmatpush1.bf16.msra.mxu0 0
    %1651 = vmatprep.subr.bf16.mxu0 0
    %1652 = vmatpush1.bf16.msra.mxu0 0
    %1653 = vmatprep.subr.bf16.mxu0 0
    %1654 = vmatpush1.bf16.msra.mxu0 0
    %1655 = vmatprep.subr.bf16.mxu0 0
    %1656 = vmatpush1.bf16.msra.mxu0 0
    %1657 = vmatprep.subr.bf16.mxu0 0
    %1658 = vmatpush1.bf16.msra.mxu0 0
    %1659 = vmatprep.subr.bf16.mxu0 0
    %1660 = vmatpush1.bf16.msra.mxu0 0
    %1661 = vmatprep.mubr.bf16.mxu0 0
    %1662 = vmatmul.mubr.bf16.gmra.mrb[0].mxu0 %v1613
    %v1663 = vpop.f32.mrb[0].mxu0
    %v1664 = vadd.f32 0.0, %v1663
    %v1665 = vpop.f32.mrb[0].mxu0
    %v1666 = vpop.f32.mrb[0].mxu0
    %v1667 = vadd.f32 0.0, %v1666
    %v1668 = vpop.f32.mrb[0].mxu0
    %1669 = vmatprep.mubr.bf16.mxu0 0
    %1670 = vmatmul.mubr.bf16.gmra.mrb[0].mxu0 %v1614
    %v1671 = vpop.f32.mrb[0].mxu0
    %v1672 = vadd.f32 0.0, %v1671
    %v1673 = vpop.f32.mrb[0].mxu0
    %v1674 = vpop.f32.mrb[0].mxu0
    %v1675 = vadd.f32 0.0, %v1674
    %v1676 = vpop.f32.mrb[0].mxu0
    %1677 = vmatprep.mubr.bf16.mxu0 0
    %1678 = vmatmul.mubr.bf16.gmra.mrb[0].mxu0 %v1615
    %v1679 = vpop.f32.mrb[0].mxu0
    %v1680 = vadd.f32 0.0, %v1679
    %v1681 = vpop.f32.mrb[0].mxu0
    %v1682 = vpop.f32.mrb[0].mxu0
    %v1683 = vadd.f32 0.0, %v1682
    %v1684 = vpop.f32.mrb[0].mxu0
    %1685 = vmatprep.mubr.bf16.mxu0 0
    %1686 = vmatmul.mubr.bf16.gmra.mrb[0].mxu0 %v1616
    %v1687 = vpop.f32.mrb[0].mxu0
    %v1688 = vadd.f32 0.0, %v1687
    %v1689 = vpop.f32.mrb[0].mxu0
    %v1690 = vpop.f32.mrb[0].mxu0
    %v1691 = vadd.f32 0.0, %v1690
    %v1692 = vpop.f32.mrb[0].mxu0
    %1693 = vmatprep.mubr.bf16.mxu0 0
    %1694 = vmatmul.mubr.bf16.gmra.mrb[0].mxu0 %v1617
    %v1695 = vpop.f32.mrb[0].mxu0
    %v1696 = vadd.f32 0.0, %v1695
    %v1697 = vpop.f32.mrb[0].mxu0
    %v1698 = vpop.f32.mrb[0].mxu0
    %v1699 = vadd.f32 0.0, %v1698
    %v1700 = vpop.f32.mrb[0].mxu0
    %1701 = vmatprep.mubr.bf16.mxu0 0
    %1702 = vmatmul.mubr.bf16.gmra.mrb[0].mxu0 %v1618
    %v1703 = vpop.f32.mrb[0].mxu0
    %v1704 = vadd.f32 0.0, %v1703
    %v1705 = vpop.f32.mrb[0].mxu0
    %v1706 = vpop.f32.mrb[0].mxu0
    %v1707 = vadd.f32 0.0, %v1706
    %v1708 = vpop.f32.mrb[0].mxu0
    %1709 = vmatprep.mubr.bf16.mxu0 0
    %1710 = vmatmul.mubr.bf16.gmra.mrb[0].mxu0 %v1619
    %v1711 = vpop.f32.mrb[0].mxu0
    %v1712 = vadd.f32 0.0, %v1711
    %v1713 = vpop.f32.mrb[0].mxu0
    %v1714 = vpop.f32.mrb[0].mxu0
    %v1715 = vadd.f32 0.0, %v1714
    %v1716 = vpop.f32.mrb[0].mxu0
    %1717 = vmatprep.mubr.bf16.mxu0 0
    %1718 = vmatmul.mubr.bf16.gmra.mrb[0].mxu0 %v1620
    %v1719 = vpop.f32.mrb[0].mxu0
    %v1720 = vadd.f32 0.0, %v1719
    %v1721 = vpop.f32.mrb[0].mxu0
    %v1722 = vpop.f32.mrb[0].mxu0
    %v1723 = vadd.f32 0.0, %v1722
    %v1724 = vpop.f32.mrb[0].mxu0
    %1725 = vdwg.mxu0
    %v1726 = vadd.f32 %v1127, %v1664
    %v1727 = vadd.f32 %v1130, %v1667
    %v1728 = vadd.f32 %v1135, %v1672
    %v1729 = vadd.f32 %v1138, %v1675
    %v1730 = vadd.f32 %v1143, %v1680
    %v1731 = vadd.f32 %v1146, %v1683
    %v1732 = vadd.f32 %v1151, %v1688
    %v1733 = vadd.f32 %v1154, %v1691
    %v1734 = vadd.f32 %v1159, %v1696
    %v1735 = vadd.f32 %v1162, %v1699
    %v1736 = vadd.f32 %v1167, %v1704
    %v1737 = vadd.f32 %v1170, %v1707
    %v1738 = vadd.f32 %v1175, %v1712
    %v1739 = vadd.f32 %v1178, %v1715
    %v1740 = vadd.f32 %v1183, %v1720
    %v1741 = vadd.f32 %v1186, %v1723
    %v1742 = vld [vmem:[#allocation2] sm:$0xf]
    %v1743 = vld [vmem:[#allocation2 + $0x4] sm:$0xf]
    %v1744 = vld [vmem:[#allocation11] sm:$0xf]
    %v1745 = vld [vmem:[#allocation11 + $0x4] sm:$0xf]
    %v1746 = vld [vmem:[#allocation11 + $0x8] sm:$0xf]
    %v1747 = vld [vmem:[#allocation11 + $0xc] sm:$0xf]
    %v1748 = vld [vmem:[#allocation11 + $0x10] sm:$0xf]
    %v1749 = vld [vmem:[#allocation11 + $0x14] sm:$0xf]
    %v1750 = vld [vmem:[#allocation11 + $0x18] sm:$0xf]
    %v1751 = vld [vmem:[#allocation11 + $0x1c] sm:$0xf]
    %v1752 = vld [vmem:[#allocation11 + $0x20] sm:$0xf]
    %v1753 = vld [vmem:[#allocation11 + $0x24] sm:$0xf]
    %v1754 = vld [vmem:[#allocation11 + $0x28] sm:$0xf]
    %v1755 = vld [vmem:[#allocation11 + $0x2c] sm:$0xf]
    %v1756 = vld [vmem:[#allocation11 + $0x30] sm:$0xf]
    %v1757 = vld [vmem:[#allocation11 + $0x34] sm:$0xf]
    %v1758 = vld [vmem:[#allocation11 + $0x38] sm:$0xf]
    %v1759 = vld [vmem:[#allocation11 + $0x3c] sm:$0xf]
    %v1760 = vld [vmem:[#allocation13] sm:$0x1]
    %v1762 = vlaneseq
    %v1763 = vshrl.u32 %v1762, 7
    %v1764 = vsub.s32 0, %v1763
    %v1765 = vrot.slane %v1760, %v1764
    %v1769 = vunpack.c.l.b16 %v1742
    %v1770 = vunpack.c.l.b16 %v1743
    %v1771 = vpack.c.b16 %v1770, %v1769
    %v1789 = vunpack.c.l.b16 %v1744
    %v1790 = vunpack.c.l.b16 %v1745
    %v1791 = vunpack.c.l.b16 %v1746
    %v1792 = vunpack.c.l.b16 %v1747
    %v1793 = vunpack.c.l.b16 %v1748
    %v1794 = vunpack.c.l.b16 %v1749
    %v1795 = vunpack.c.l.b16 %v1750
    %v1796 = vunpack.c.l.b16 %v1751
    %v1797 = vunpack.c.l.b16 %v1752
    %v1798 = vunpack.c.l.b16 %v1753
    %v1799 = vunpack.c.l.b16 %v1754
    %v1800 = vunpack.c.l.b16 %v1755
    %v1801 = vunpack.c.l.b16 %v1756
    %v1802 = vunpack.c.l.b16 %v1757
    %v1803 = vunpack.c.l.b16 %v1758
    %v1804 = vunpack.c.l.b16 %v1759
    %v1805 = vpack.c.b16 %v1790, %v1789
    %v1806 = vpack.c.b16 %v1792, %v1791
    %v1807 = vpack.c.b16 %v1794, %v1793
    %v1808 = vpack.c.b16 %v1796, %v1795
    %v1809 = vpack.c.b16 %v1798, %v1797
    %v1810 = vpack.c.b16 %v1800, %v1799
    %v1811 = vpack.c.b16 %v1802, %v1801
    %v1812 = vpack.c.b16 %v1804, %v1803
    %1821 = vmatprep.subr.bf16.mxu0 0
    %1822 = vmatpush1.bf16.msra.mxu0 %v1805
    %1823 = vmatprep.subr.bf16.mxu0 0
    %1824 = vmatpush1.bf16.msra.mxu0 %v1806
    %1825 = vmatprep.subr.bf16.mxu0 0
    %1826 = vmatpush1.bf16.msra.mxu0 %v1807
    %1827 = vmatprep.subr.bf16.mxu0 0
    %1828 = vmatpush1.bf16.msra.mxu0 %v1808
    %1829 = vmatprep.subr.bf16.mxu0 0
    %1830 = vmatpush1.bf16.msra.mxu0 %v1809
    %1831 = vmatprep.subr.bf16.mxu0 0
    %1832 = vmatpush1.bf16.msra.mxu0 %v1810
    %1833 = vmatprep.subr.bf16.mxu0 0
    %1834 = vmatpush1.bf16.msra.mxu0 %v1811
    %1835 = vmatprep.subr.bf16.mxu0 0
    %1836 = vmatpush1.bf16.msra.mxu0 %v1812
    %1837 = vmatprep.subr.bf16.mxu0 0
    %1838 = vmatpush1.bf16.msra.mxu0 0
    %1839 = vmatprep.subr.bf16.mxu0 0
    %1840 = vmatpush1.bf16.msra.mxu0 0
    %1841 = vmatprep.subr.bf16.mxu0 0
    %1842 = vmatpush1.bf16.msra.mxu0 0
    %1843 = vmatprep.subr.bf16.mxu0 0
    %1844 = vmatpush1.bf16.msra.mxu0 0
    %1845 = vmatprep.subr.bf16.mxu0 0
    %1846 = vmatpush1.bf16.msra.mxu0 0
    %1847 = vmatprep.subr.bf16.mxu0 0
    %1848 = vmatpush1.bf16.msra.mxu0 0
    %1849 = vmatprep.subr.bf16.mxu0 0
    %1850 = vmatpush1.bf16.msra.mxu0 0
    %1851 = vmatprep.subr.bf16.mxu0 0
    %1852 = vmatpush1.bf16.msra.mxu0 0
    %1853 = vmatprep.mubr.bf16.mxu0 0
    %1854 = vmatmul.mubr.bf16.gmra.mrb[0].mxu0 %v1771
    %v1855 = vpop.f32.mrb[0].mxu0
    %v1856 = vadd.f32 %v1765, %v1855
    %v1857 = vpop.f32.mrb[0].mxu0
    %v1858 = vpop.f32.mrb[0].mxu0
    %v1859 = vadd.f32 %v1765, %v1858
    %v1860 = vpop.f32.mrb[0].mxu0
    %1861 = vdwg.mxu0
    %v1862 = vmax.f32 %v1856, 0.0
    %v1863 = vmax.f32 %v1859, 0.0
    %v1864 = vpack.c.bf16 %v1863, %v1862
    %v1865 = vld [vmem:[#allocation14] sm:$0xf]
    %v1866 = vld [vmem:[#allocation14 + $0x4] sm:$0xf]
    %v1867 = vld [vmem:[#allocation14 + $0x8] sm:$0xf]
    %v1868 = vld [vmem:[#allocation14 + $0xc] sm:$0xf]
    %v1869 = vld [vmem:[#allocation14 + $0x10] sm:$0xf]
    %v1870 = vld [vmem:[#allocation14 + $0x14] sm:$0xf]
    %v1871 = vld [vmem:[#allocation14 + $0x18] sm:$0xf]
    %v1872 = vld [vmem:[#allocation14 + $0x1c] sm:$0xf]
    %v1873 = vld [vmem:[#allocation14 + $0x20] sm:$0xf]
    %v1874 = vld [vmem:[#allocation14 + $0x24] sm:$0xf]
    %v1875 = vld [vmem:[#allocation14 + $0x28] sm:$0xf]
    %v1876 = vld [vmem:[#allocation14 + $0x2c] sm:$0xf]
    %v1877 = vld [vmem:[#allocation14 + $0x30] sm:$0xf]
    %v1878 = vld [vmem:[#allocation14 + $0x34] sm:$0xf]
    %v1879 = vld [vmem:[#allocation14 + $0x38] sm:$0xf]
    %v1880 = vld [vmem:[#allocation14 + $0x3c] sm:$0xf]
    %v1881 = vld [vmem:[#allocation16] sm:$0x1]
    %v1883 = vlaneseq
    %v1884 = vshrl.u32 %v1883, 7
    %v1885 = vsub.s32 0, %v1884
    %v1886 = vrot.slane %v1881, %v1885
    %v1904 = vunpack.c.l.b16 %v1865
    %v1905 = vunpack.c.l.b16 %v1866
    %v1906 = vunpack.c.l.b16 %v1867
    %v1907 = vunpack.c.l.b16 %v1868
    %v1908 = vunpack.c.l.b16 %v1869
    %v1909 = vunpack.c.l.b16 %v1870
    %v1910 = vunpack.c.l.b16 %v1871
    %v1911 = vunpack.c.l.b16 %v1872
    %v1912 = vunpack.c.l.b16 %v1873
    %v1913 = vunpack.c.l.b16 %v1874
    %v1914 = vunpack.c.l.b16 %v1875
    %v1915 = vunpack.c.l.b16 %v1876
    %v1916 = vunpack.c.l.b16 %v1877
    %v1917 = vunpack.c.l.b16 %v1878
    %v1918 = vunpack.c.l.b16 %v1879
    %v1919 = vunpack.c.l.b16 %v1880
    %v1920 = vpack.c.b16 %v1905, %v1904
    %v1921 = vpack.c.b16 %v1907, %v1906
    %v1922 = vpack.c.b16 %v1909, %v1908
    %v1923 = vpack.c.b16 %v1911, %v1910
    %v1924 = vpack.c.b16 %v1913, %v1912
    %v1925 = vpack.c.b16 %v1915, %v1914
    %v1926 = vpack.c.b16 %v1917, %v1916
    %v1927 = vpack.c.b16 %v1919, %v1918
    %1936 = vmatprep.subr.bf16.mxu0 0
    %1937 = vmatpush1.bf16.msra.mxu0 %v1920
    %1938 = vmatprep.subr.bf16.mxu0 0
    %1939 = vmatpush1.bf16.msra.mxu0 %v1921
    %1940 = vmatprep.subr.bf16.mxu0 0
    %1941 = vmatpush1.bf16.msra.mxu0 %v1922
    %1942 = vmatprep.subr.bf16.mxu0 0
    %1943 = vmatpush1.bf16.msra.mxu0 %v1923
    %1944 = vmatprep.subr.bf16.mxu0 0
    %1945 = vmatpush1.bf16.msra.mxu0 %v1924
    %1946 = vmatprep.subr.bf16.mxu0 0
    %1947 = vmatpush1.bf16.msra.mxu0 %v1925
    %1948 = vmatprep.subr.bf16.mxu0 0
    %1949 = vmatpush1.bf16.msra.mxu0 %v1926
    %1950 = vmatprep.subr.bf16.mxu0 0
    %1951 = vmatpush1.bf16.msra.mxu0 %v1927
    %1952 = vmatprep.subr.bf16.mxu0 0
    %1953 = vmatpush1.bf16.msra.mxu0 0
    %1954 = vmatprep.subr.bf16.mxu0 0
    %1955 = vmatpush1.bf16.msra.mxu0 0
    %1956 = vmatprep.subr.bf16.mxu0 0
    %1957 = vmatpush1.bf16.msra.mxu0 0
    %1958 = vmatprep.subr.bf16.mxu0 0
    %1959 = vmatpush1.bf16.msra.mxu0 0
    %1960 = vmatprep.subr.bf16.mxu0 0
    %1961 = vmatpush1.bf16.msra.mxu0 0
    %1962 = vmatprep.subr.bf16.mxu0 0
    %1963 = vmatpush1.bf16.msra.mxu0 0
    %1964 = vmatprep.subr.bf16.mxu0 0
    %1965 = vmatpush1.bf16.msra.mxu0 0
    %1966 = vmatprep.subr.bf16.mxu0 0
    %1967 = vmatpush1.bf16.msra.mxu0 0
    %1968 = vmatprep.mubr.bf16.mxu0 0
    %1969 = vmatmul.mubr.bf16.gmra.mrb[0].mxu0 %v1864
    %v1970 = vpop.f32.mrb[0].mxu0
    %v1971 = vadd.f32 %v1886, %v1970
    %v1972 = vpop.f32.mrb[0].mxu0
    %v1973 = vpop.f32.mrb[0].mxu0
    %v1974 = vadd.f32 %v1886, %v1973
    %v1975 = vpop.f32.mrb[0].mxu0
    %1976 = vdwg.mxu0
    %v1977 = vpack.c.bf16 %v1727, %v1726
    %v1978 = vpack.c.bf16 %v1729, %v1728
    %v1979 = vpack.c.bf16 %v1731, %v1730
    %v1980 = vpack.c.bf16 %v1733, %v1732
    %v1981 = vpack.c.bf16 %v1735, %v1734
    %v1982 = vpack.c.bf16 %v1737, %v1736
    %v1983 = vpack.c.bf16 %v1739, %v1738
    %v1984 = vpack.c.bf16 %v1741, %v1740
    %v1985 = vld [vmem:[%s17] sm:$0xf]
    %v1986 = vld [vmem:[%s17 + $0x4] sm:$0xf]
    %v1987 = vld [vmem:[%s17 + $0x8] sm:$0xf]
    %v1988 = vld [vmem:[%s17 + $0xc] sm:$0xf]
    %v1989 = vld [vmem:[%s17 + $0x10] sm:$0xf]
    %v1990 = vld [vmem:[%s17 + $0x14] sm:$0xf]
    %v1991 = vld [vmem:[%s17 + $0x18] sm:$0xf]
    %v1992 = vld [vmem:[%s17 + $0x1c] sm:$0xf]
    %v1993 = vld [vmem:[%s17 + $0x20] sm:$0xf]
    %v1994 = vld [vmem:[%s17 + $0x24] sm:$0xf]
    %v1995 = vld [vmem:[%s17 + $0x28] sm:$0xf]
    %v1996 = vld [vmem:[%s17 + $0x2c] sm:$0xf]
    %v1997 = vld [vmem:[%s17 + $0x30] sm:$0xf]
    %v1998 = vld [vmem:[%s17 + $0x34] sm:$0xf]
    %v1999 = vld [vmem:[%s17 + $0x38] sm:$0xf]
    %v2000 = vld [vmem:[%s17 + $0x3c] sm:$0xf]
    %v2001 = vld [vmem:[%s18] sm:$0x1]
    %v2003 = vlaneseq
    %v2004 = vshrl.u32 %v2003, 7
    %v2005 = vsub.s32 0, %v2004
    %v2006 = vrot.slane %v2001, %v2005
    %v2024 = vunpack.c.l.b16 %v1985
    %v2025 = vunpack.c.l.b16 %v1986
    %v2026 = vunpack.c.l.b16 %v1987
    %v2027 = vunpack.c.l.b16 %v1988
    %v2028 = vunpack.c.l.b16 %v1989
    %v2029 = vunpack.c.l.b16 %v1990
    %v2030 = vunpack.c.l.b16 %v1991
    %v2031 = vunpack.c.l.b16 %v1992
    %v2032 = vunpack.c.l.b16 %v1993
    %v2033 = vunpack.c.l.b16 %v1994
    %v2034 = vunpack.c.l.b16 %v1995
    %v2035 = vunpack.c.l.b16 %v1996
    %v2036 = vunpack.c.l.b16 %v1997
    %v2037 = vunpack.c.l.b16 %v1998
    %v2038 = vunpack.c.l.b16 %v1999
    %v2039 = vunpack.c.l.b16 %v2000
    %v2040 = vpack.c.b16 %v2025, %v2024
    %v2041 = vpack.c.b16 %v2027, %v2026
    %v2042 = vpack.c.b16 %v2029, %v2028
    %v2043 = vpack.c.b16 %v2031, %v2030
    %v2044 = vpack.c.b16 %v2033, %v2032
    %v2045 = vpack.c.b16 %v2035, %v2034
    %v2046 = vpack.c.b16 %v2037, %v2036
    %v2047 = vpack.c.b16 %v2039, %v2038
    %2056 = vmatprep.subr.bf16.mxu0 0
    %2057 = vmatpush1.bf16.msra.mxu0 %v2040
    %2058 = vmatprep.subr.bf16.mxu0 0
    %2059 = vmatpush1.bf16.msra.mxu0 %v2041
    %2060 = vmatprep.subr.bf16.mxu0 0
    %2061 = vmatpush1.bf16.msra.mxu0 %v2042
    %2062 = vmatprep.subr.bf16.mxu0 0
    %2063 = vmatpush1.bf16.msra.mxu0 %v2043
    %2064 = vmatprep.subr.bf16.mxu0 0
    %2065 = vmatpush1.bf16.msra.mxu0 %v2044
    %2066 = vmatprep.subr.bf16.mxu0 0
    %2067 = vmatpush1.bf16.msra.mxu0 %v2045
    %2068 = vmatprep.subr.bf16.mxu0 0
    %2069 = vmatpush1.bf16.msra.mxu0 %v2046
    %2070 = vmatprep.subr.bf16.mxu0 0
    %2071 = vmatpush1.bf16.msra.mxu0 %v2047
    %2072 = vmatprep.subr.bf16.mxu0 0
    %2073 = vmatpush1.bf16.msra.mxu0 0
    %2074 = vmatprep.subr.bf16.mxu0 0
    %2075 = vmatpush1.bf16.msra.mxu0 0
    %2076 = vmatprep.subr.bf16.mxu0 0
    %2077 = vmatpush1.bf16.msra.mxu0 0
    %2078 = vmatprep.subr.bf16.mxu0 0
    %2079 = vmatpush1.bf16.msra.mxu0 0
    %2080 = vmatprep.subr.bf16.mxu0 0
    %2081 = vmatpush1.bf16.msra.mxu0 0
    %2082 = vmatprep.subr.bf16.mxu0 0
    %2083 = vmatpush1.bf16.msra.mxu0 0
    %2084 = vmatprep.subr.bf16.mxu0 0
    %2085 = vmatpush1.bf16.msra.mxu0 0
    %2086 = vmatprep.subr.bf16.mxu0 0
    %2087 = vmatpush1.bf16.msra.mxu0 0
    %2088 = vmatprep.mubr.bf16.mxu0 0
    %2089 = vmatmul.mubr.bf16.gmra.mrb[0].mxu0 %v1977
    %v2090 = vpop.f32.mrb[0].mxu0
    %v2091 = vadd.f32 %v2006, %v2090
    %v2092 = vpop.f32.mrb[0].mxu0
    %v2093 = vpop.f32.mrb[0].mxu0
    %v2094 = vadd.f32 %v2006, %v2093
    %v2095 = vpop.f32.mrb[0].mxu0
    %2096 = vmatprep.mubr.bf16.mxu0 0
    %2097 = vmatmul.mubr.bf16.gmra.mrb[0].mxu0 %v1978
    %v2098 = vpop.f32.mrb[0].mxu0
    %v2099 = vadd.f32 %v2006, %v2098
    %v2100 = vpop.f32.mrb[0].mxu0
    %v2101 = vpop.f32.mrb[0].mxu0
    %v2102 = vadd.f32 %v2006, %v2101
    %v2103 = vpop.f32.mrb[0].mxu0
    %2104 = vmatprep.mubr.bf16.mxu0 0
    %2105 = vmatmul.mubr.bf16.gmra.mrb[0].mxu0 %v1979
    %v2106 = vpop.f32.mrb[0].mxu0
    %v2107 = vadd.f32 %v2006, %v2106
    %v2108 = vpop.f32.mrb[0].mxu0
    %v2109 = vpop.f32.mrb[0].mxu0
    %v2110 = vadd.f32 %v2006, %v2109
    %v2111 = vpop.f32.mrb[0].mxu0
    %2112 = vmatprep.mubr.bf16.mxu0 0
    %2113 = vmatmul.mubr.bf16.gmra.mrb[0].mxu0 %v1980
    %v2114 = vpop.f32.mrb[0].mxu0
    %v2115 = vadd.f32 %v2006, %v2114
    %v2116 = vpop.f32.mrb[0].mxu0
    %v2117 = vpop.f32.mrb[0].mxu0
    %v2118 = vadd.f32 %v2006, %v2117
    %v2119 = vpop.f32.mrb[0].mxu0
    %2120 = vmatprep.mubr.bf16.mxu0 0
    %2121 = vmatmul.mubr.bf16.gmra.mrb[0].mxu0 %v1981
    %v2122 = vpop.f32.mrb[0].mxu0
    %v2123 = vadd.f32 %v2006, %v2122
    %v2124 = vpop.f32.mrb[0].mxu0
    %v2125 = vpop.f32.mrb[0].mxu0
    %v2126 = vadd.f32 %v2006, %v2125
    %v2127 = vpop.f32.mrb[0].mxu0
    %2128 = vmatprep.mubr.bf16.mxu0 0
    %2129 = vmatmul.mubr.bf16.gmra.mrb[0].mxu0 %v1982
    %v2130 = vpop.f32.mrb[0].mxu0
    %v2131 = vadd.f32 %v2006, %v2130
    %v2132 = vpop.f32.mrb[0].mxu0
    %v2133 = vpop.f32.mrb[0].mxu0
    %v2134 = vadd.f32 %v2006, %v2133
    %v2135 = vpop.f32.mrb[0].mxu0
    %2136 = vmatprep.mubr.bf16.mxu0 0
    %2137 = vmatmul.mubr.bf16.gmra.mrb[0].mxu0 %v1983
    %v2138 = vpop.f32.mrb[0].mxu0
    %v2139 = vadd.f32 %v2006, %v2138
    %v2140 = vpop.f32.mrb[0].mxu0
    %v2141 = vpop.f32.mrb[0].mxu0
    %v2142 = vadd.f32 %v2006, %v2141
    %v2143 = vpop.f32.mrb[0].mxu0
    %2144 = vmatprep.mubr.bf16.mxu0 0
    %2145 = vmatmul.mubr.bf16.gmra.mrb[0].mxu0 %v1984
    %v2146 = vpop.f32.mrb[0].mxu0
    %v2147 = vadd.f32 %v2006, %v2146
    %v2148 = vpop.f32.mrb[0].mxu0
    %v2149 = vpop.f32.mrb[0].mxu0
    %v2150 = vadd.f32 %v2006, %v2149
    %v2151 = vpop.f32.mrb[0].mxu0
    %2152 = vdwg.mxu0
    %v2153 = vmax.f32 %v2091, 0.0
    %v2154 = vmax.f32 %v2094, 0.0
    %v2155 = vmax.f32 %v2099, 0.0
    %v2156 = vmax.f32 %v2102, 0.0
    %v2157 = vmax.f32 %v2107, 0.0
    %v2158 = vmax.f32 %v2110, 0.0
    %v2159 = vmax.f32 %v2115, 0.0
    %v2160 = vmax.f32 %v2118, 0.0
    %v2161 = vmax.f32 %v2123, 0.0
    %v2162 = vmax.f32 %v2126, 0.0
    %v2163 = vmax.f32 %v2131, 0.0
    %v2164 = vmax.f32 %v2134, 0.0
    %v2165 = vmax.f32 %v2139, 0.0
    %v2166 = vmax.f32 %v2142, 0.0
    %v2167 = vmax.f32 %v2147, 0.0
    %v2168 = vmax.f32 %v2150, 0.0
    %v2169 = vpack.c.bf16 %v2154, %v2153
    %v2170 = vpack.c.bf16 %v2156, %v2155
    %v2171 = vpack.c.bf16 %v2158, %v2157
    %v2172 = vpack.c.bf16 %v2160, %v2159
    %v2173 = vpack.c.bf16 %v2162, %v2161
    %v2174 = vpack.c.bf16 %v2164, %v2163
    %v2175 = vpack.c.bf16 %v2166, %v2165
    %v2176 = vpack.c.bf16 %v2168, %v2167
    %v2177 = vld [vmem:[#allocation29] sm:$0xf]
    %v2178 = vld [vmem:[#allocation29 + $0x4] sm:$0xf]
    %v2179 = vld [vmem:[#allocation29 + $0x8] sm:$0xf]
    %v2180 = vld [vmem:[#allocation29 + $0xc] sm:$0xf]
    %v2181 = vld [vmem:[#allocation29 + $0x10] sm:$0xf]
    %v2182 = vld [vmem:[#allocation29 + $0x14] sm:$0xf]
    %v2183 = vld [vmem:[#allocation29 + $0x18] sm:$0xf]
    %v2184 = vld [vmem:[#allocation29 + $0x1c] sm:$0xf]
    %v2185 = vld [vmem:[#allocation29 + $0x20] sm:$0xf]
    %v2186 = vld [vmem:[#allocation29 + $0x24] sm:$0xf]
    %v2187 = vld [vmem:[#allocation29 + $0x28] sm:$0xf]
    %v2188 = vld [vmem:[#allocation29 + $0x2c] sm:$0xf]
    %v2189 = vld [vmem:[#allocation29 + $0x30] sm:$0xf]
    %v2190 = vld [vmem:[#allocation29 + $0x34] sm:$0xf]
    %v2191 = vld [vmem:[#allocation29 + $0x38] sm:$0xf]
    %v2192 = vld [vmem:[#allocation29 + $0x3c] sm:$0xf]
    %v2193 = vld [vmem:[%s20] sm:$0x1]
    %v2195 = vlaneseq
    %v2196 = vshrl.u32 %v2195, 7
    %v2197 = vsub.s32 0, %v2196
    %v2198 = vrot.slane %v2193, %v2197
    %v2216 = vunpack.c.l.b16 %v2177
    %v2217 = vunpack.c.l.b16 %v2178
    %v2218 = vunpack.c.l.b16 %v2179
    %v2219 = vunpack.c.l.b16 %v2180
    %v2220 = vunpack.c.l.b16 %v2181
    %v2221 = vunpack.c.l.b16 %v2182
    %v2222 = vunpack.c.l.b16 %v2183
    %v2223 = vunpack.c.l.b16 %v2184
    %v2224 = vunpack.c.l.b16 %v2185
    %v2225 = vunpack.c.l.b16 %v2186
    %v2226 = vunpack.c.l.b16 %v2187
    %v2227 = vunpack.c.l.b16 %v2188
    %v2228 = vunpack.c.l.b16 %v2189
    %v2229 = vunpack.c.l.b16 %v2190
    %v2230 = vunpack.c.l.b16 %v2191
    %v2231 = vunpack.c.l.b16 %v2192
    %v2232 = vpack.c.b16 %v2217, %v2216
    %v2233 = vpack.c.b16 %v2219, %v2218
    %v2234 = vpack.c.b16 %v2221, %v2220
    %v2235 = vpack.c.b16 %v2223, %v2222
    %v2236 = vpack.c.b16 %v2225, %v2224
    %v2237 = vpack.c.b16 %v2227, %v2226
    %v2238 = vpack.c.b16 %v2229, %v2228
    %v2239 = vpack.c.b16 %v2231, %v2230
    %2248 = vmatprep.subr.bf16.mxu0 0
    %2249 = vmatpush1.bf16.msra.mxu0 %v2232
    %2250 = vmatprep.subr.bf16.mxu0 0
    %2251 = vmatpush1.bf16.msra.mxu0 %v2233
    %2252 = vmatprep.subr.bf16.mxu0 0
    %2253 = vmatpush1.bf16.msra.mxu0 %v2234
    %2254 = vmatprep.subr.bf16.mxu0 0
    %2255 = vmatpush1.bf16.msra.mxu0 %v2235
    %2256 = vmatprep.subr.bf16.mxu0 0
    %2257 = vmatpush1.bf16.msra.mxu0 %v2236
    %2258 = vmatprep.subr.bf16.mxu0 0
    %2259 = vmatpush1.bf16.msra.mxu0 %v2237
    %2260 = vmatprep.subr.bf16.mxu0 0
    %2261 = vmatpush1.bf16.msra.mxu0 %v2238
    %2262 = vmatprep.subr.bf16.mxu0 0
    %2263 = vmatpush1.bf16.msra.mxu0 %v2239
    %2264 = vmatprep.subr.bf16.mxu0 0
    %2265 = vmatpush1.bf16.msra.mxu0 0
    %2266 = vmatprep.subr.bf16.mxu0 0
    %2267 = vmatpush1.bf16.msra.mxu0 0
    %2268 = vmatprep.subr.bf16.mxu0 0
    %2269 = vmatpush1.bf16.msra.mxu0 0
    %2270 = vmatprep.subr.bf16.mxu0 0
    %2271 = vmatpush1.bf16.msra.mxu0 0
    %2272 = vmatprep.subr.bf16.mxu0 0
    %2273 = vmatpush1.bf16.msra.mxu0 0
    %2274 = vmatprep.subr.bf16.mxu0 0
    %2275 = vmatpush1.bf16.msra.mxu0 0
    %2276 = vmatprep.subr.bf16.mxu0 0
    %2277 = vmatpush1.bf16.msra.mxu0 0
    %2278 = vmatprep.subr.bf16.mxu0 0
    %2279 = vmatpush1.bf16.msra.mxu0 0
    %2280 = vmatprep.mubr.bf16.mxu0 0
    %2281 = vmatmul.mubr.bf16.gmra.mrb[0].mxu0 %v2169
    %v2282 = vpop.f32.mrb[0].mxu0
    %v2283 = vadd.f32 %v2198, %v2282
    %v2284 = vpop.f32.mrb[0].mxu0
    %v2285 = vpop.f32.mrb[0].mxu0
    %v2286 = vadd.f32 %v2198, %v2285
    %v2287 = vpop.f32.mrb[0].mxu0
    %2288 = vmatprep.mubr.bf16.mxu0 0
    %2289 = vmatmul.mubr.bf16.gmra.mrb[0].mxu0 %v2170
    %v2290 = vpop.f32.mrb[0].mxu0
    %v2291 = vadd.f32 %v2198, %v2290
    %v2292 = vpop.f32.mrb[0].mxu0
    %v2293 = vpop.f32.mrb[0].mxu0
    %v2294 = vadd.f32 %v2198, %v2293
    %v2295 = vpop.f32.mrb[0].mxu0
    %2296 = vmatprep.mubr.bf16.mxu0 0
    %2297 = vmatmul.mubr.bf16.gmra.mrb[0].mxu0 %v2171
    %v2298 = vpop.f32.mrb[0].mxu0
    %v2299 = vadd.f32 %v2198, %v2298
    %v2300 = vpop.f32.mrb[0].mxu0
    %v2301 = vpop.f32.mrb[0].mxu0
    %v2302 = vadd.f32 %v2198, %v2301
    %v2303 = vpop.f32.mrb[0].mxu0
    %2304 = vmatprep.mubr.bf16.mxu0 0
    %2305 = vmatmul.mubr.bf16.gmra.mrb[0].mxu0 %v2172
    %v2306 = vpop.f32.mrb[0].mxu0
    %v2307 = vadd.f32 %v2198, %v2306
    %v2308 = vpop.f32.mrb[0].mxu0
    %v2309 = vpop.f32.mrb[0].mxu0
    %v2310 = vadd.f32 %v2198, %v2309
    %v2311 = vpop.f32.mrb[0].mxu0
    %2312 = vmatprep.mubr.bf16.mxu0 0
    %2313 = vmatmul.mubr.bf16.gmra.mrb[0].mxu0 %v2173
    %v2314 = vpop.f32.mrb[0].mxu0
    %v2315 = vadd.f32 %v2198, %v2314
    %v2316 = vpop.f32.mrb[0].mxu0
    %v2317 = vpop.f32.mrb[0].mxu0
    %v2318 = vadd.f32 %v2198, %v2317
    %v2319 = vpop.f32.mrb[0].mxu0
    %2320 = vmatprep.mubr.bf16.mxu0 0
    %2321 = vmatmul.mubr.bf16.gmra.mrb[0].mxu0 %v2174
    %v2322 = vpop.f32.mrb[0].mxu0
    %v2323 = vadd.f32 %v2198, %v2322
    %v2324 = vpop.f32.mrb[0].mxu0
    %v2325 = vpop.f32.mrb[0].mxu0
    %v2326 = vadd.f32 %v2198, %v2325
    %v2327 = vpop.f32.mrb[0].mxu0
    %2328 = vmatprep.mubr.bf16.mxu0 0
    %2329 = vmatmul.mubr.bf16.gmra.mrb[0].mxu0 %v2175
    %v2330 = vpop.f32.mrb[0].mxu0
    %v2331 = vadd.f32 %v2198, %v2330
    %v2332 = vpop.f32.mrb[0].mxu0
    %v2333 = vpop.f32.mrb[0].mxu0
    %v2334 = vadd.f32 %v2198, %v2333
    %v2335 = vpop.f32.mrb[0].mxu0
    %2336 = vmatprep.mubr.bf16.mxu0 0
    %2337 = vmatmul.mubr.bf16.gmra.mrb[0].mxu0 %v2176
    %v2338 = vpop.f32.mrb[0].mxu0
    %v2339 = vadd.f32 %v2198, %v2338
    %v2340 = vpop.f32.mrb[0].mxu0
    %v2341 = vpop.f32.mrb[0].mxu0
    %v2342 = vadd.f32 %v2198, %v2341
    %v2343 = vpop.f32.mrb[0].mxu0
    %2344 = vdwg.mxu0
    %v2345 = vld [vmem:[#allocation8] sm:$0xf]
    %v2346 = vld [vmem:[#allocation8 + $0x4] sm:$0xf]
    %v2347 = vpack.c.bf16 %v2286, %v2283
    %v2348 = vpack.c.bf16 %v2294, %v2291
    %v2349 = vpack.c.bf16 %v2302, %v2299
    %v2350 = vpack.c.bf16 %v2310, %v2307
    %v2351 = vpack.c.bf16 %v2318, %v2315
    %v2352 = vpack.c.bf16 %v2326, %v2323
    %v2353 = vpack.c.bf16 %v2334, %v2331
    %v2354 = vpack.c.bf16 %v2342, %v2339
    %v2357 = vunpack.c.l.b16 %v2345
    %v2358 = vunpack.c.l.b16 %v2346
    %v2359 = vpack.c.b16 %v2358, %v2357
    %2361 = vmatprep.subr.bf16.mxu0 0
    %2362 = vmatpush1.bf16.msra.mxu0 %v2347
    %2363 = vmatprep.subr.bf16.mxu0 0
    %2364 = vmatpush1.bf16.msra.mxu0 %v2348
    %2365 = vmatprep.subr.bf16.mxu0 0
    %2366 = vmatpush1.bf16.msra.mxu0 %v2349
    %2367 = vmatprep.subr.bf16.mxu0 0
    %2368 = vmatpush1.bf16.msra.mxu0 %v2350
    %2369 = vmatprep.subr.bf16.mxu0 0
    %2370 = vmatpush1.bf16.msra.mxu0 %v2351
    %2371 = vmatprep.subr.bf16.mxu0 0
    %2372 = vmatpush1.bf16.msra.mxu0 %v2352
    %2373 = vmatprep.subr.bf16.mxu0 0
    %2374 = vmatpush1.bf16.msra.mxu0 %v2353
    %2375 = vmatprep.subr.bf16.mxu0 0
    %2376 = vmatpush1.bf16.msra.mxu0 %v2354
    %2377 = vmatprep.subr.bf16.mxu0 0
    %2378 = vmatpush1.bf16.msra.mxu0 0
    %2379 = vmatprep.subr.bf16.mxu0 0
    %2380 = vmatpush1.bf16.msra.mxu0 0
    %2381 = vmatprep.subr.bf16.mxu0 0
    %2382 = vmatpush1.bf16.msra.mxu0 0
    %2383 = vmatprep.subr.bf16.mxu0 0
    %2384 = vmatpush1.bf16.msra.mxu0 0
    %2385 = vmatprep.subr.bf16.mxu0 0
    %2386 = vmatpush1.bf16.msra.mxu0 0
    %2387 = vmatprep.subr.bf16.mxu0 0
    %2388 = vmatpush1.bf16.msra.mxu0 0
    %2389 = vmatprep.subr.bf16.mxu0 0
    %2390 = vmatpush1.bf16.msra.mxu0 0
    %2391 = vmatprep.subr.bf16.mxu0 0
    %2392 = vmatpush1.bf16.msra.mxu0 0
    %2393 = vmatprep.mubr.bf16.mxu0 0
    %2394 = vmatmul.mubr.bf16.gmra.mrb[0].mxu0 %v2359
    %v2395 = vpop.f32.mrb[0].mxu0
    %v2396 = vadd.f32 0.0, %v2395
    %v2397 = vpop.f32.mrb[0].mxu0
    %v2398 = vpop.f32.mrb[0].mxu0
    %v2399 = vadd.f32 0.0, %v2398
    %v2400 = vpop.f32.mrb[0].mxu0
    %2401 = vdwg.mxu0
    %v2402 = vadd.f32 %v1971, %v2396
    %v2403 = vadd.f32 %v1974, %v2399
    %2404 = vst [vmem:[#allocation34] sm:$0xff] %v2402
    %2405 = vst [vmem:[#allocation34 + $0x8] sm:$0xff] %v2403
    // Predicated region
    $region182: #{tpu_custom_call.1} parent=1 // pred_check
      _
    $region183: #{tpu_custom_call.1} parent=1 // pred_check_branch
      %2407 = sbr.rel (0) target = $region185
    $region184: #{tpu_custom_call.1} parent=1 // pred_region
      %s2409 = ssub.s32 256, 256
      %2410 = vsyncadd [#allocation4], %s2409
      %s2411 = sshll.u32 [#allocation34], 4
      %s2412 = int_to_ptr.vmem [resolvable:$true] %s2411
      %2417 = dma.vmem_to_hbm [thread:$0]  %s2412, 256, %s25, [#allocation4], 128, 128, 8
    $region185: #{tpu_custom_call.1} parent=1 // pred_fallthru
      _
    // Predicated region
    $region186: #{tpu_custom_call.1} parent=1 // pred_check
      _
    $region187: #{tpu_custom_call.1} parent=1 // pred_check_branch
      %2419 = sbr.rel (0) target = $region189
    $region188: #{tpu_custom_call.1} parent=1 // pred_region
      %2420 = dma.done [#allocation4], 256
    $region189: #{tpu_custom_call.1} parent=1 // pred_fallthru
      _
    %2421 = vsyncpa [#allocation3], 1
    %2422 = vsyncpa [#allocation6], 1
    %2423 = vsyncpa [#allocation9], 1
    %2424 = vsyncpa [#allocation12], 1
    %2425 = vsyncpa [#allocation15], 1
    %2426 = vsyncpa [#allocation18], 1
    %2427 = vsyncpa [#allocation21], 1
    %2428 = vsyncpa [#allocation24], 1
    %2429 = vsyncpa [#allocation27], 1
    %2430 = vsyncpa [#allocation30], 1
    %2431 = vsyncpa [#allocation33], 1
    %2432 = vsyncpa [#allocation4], 1

</llo_original>
